<compile_context>
chip_gen: v7x
topology: tpu7x:2x2x1
jax: 0.10.0
libtpu: 0.0.40
codegen_flags: <defaults>
</compile_context>

<pallas_src>
import functools

import jax
import jax.numpy as jnp
from jax.experimental import pallas as pl
from jax.experimental.pallas import tpu as pltpu


def _upsample_kernel(xfa_ref, xta_ref, out_ref, *, num_k: int, tile_q: int):
    # xfa_ref: (1, D+1, N)  [x ; ones]          native dtype, resident per batch
    # xta_ref: (1, N, D+1)  [2*x^T , -|x|^2]    native dtype, resident per batch
    # out_ref: (1, D, TQ)   mean of num_k nearest-neighbour features
    q = pl.program_id(1)
    d = out_ref.shape[1]
    n_pts = xfa_ref.shape[2]

    xfa = xfa_ref[0]                                       # (D+1, N)
    xta = xta_ref[0]                                       # (N, D+1)

    if tile_q == n_pts:
        # Single query tile: the queries are all points.
        start = 0
        xq_aug = xfa                                       # (D+1, N)
    else:
        # tile_q is a multiple of 128 (wrapper-checked): lane-aligned slice of
        # the resident block -> no separate query input / DMA stream.
        start = pl.multiple_of(q * tile_q, 128)
        xq_aug = xfa_ref[0, :, pl.ds(start, tile_q)]       # (D+1, TQ)

    # scores[j, i] = 2*<x_j, q_i> - |x_j|^2  (one canonical MXU matmul; the
    # per-query constant -|q_i|^2 is dropped -- it cannot change top-k).
    scores = jnp.dot(xta, xq_aug,
                     preferred_element_type=jnp.float32,
                     precision=jax.lax.Precision.HIGHEST)  # (N, TQ) f32

    # Exclude self: point j == global query index (start + i).
    big = jnp.float32(1e30)
    pt = jax.lax.broadcasted_iota(jnp.int32, (n_pts, tile_q), 0)
    qry = start + jax.lax.broadcasted_iota(jnp.int32, (n_pts, tile_q), 1)
    scores = jnp.where(pt == qry, -big, scores)

    # Iterative top-k: per iteration one cheap (1,TQ) column max, one select
    # that re-stores `scores`, and one MXU accumulate of the selected features
    # (xfa's ones row simultaneously accumulates the selection count).
    acc = jnp.zeros((d + 1, tile_q), jnp.float32)
    for _ in range(num_k):                                 # num_k tiny, unrolled
        colmax = jnp.max(scores, axis=0, keepdims=True)    # (1, TQ)
        hit = scores >= colmax                             # (N, TQ) 0/1
        acc = acc + jnp.dot(xfa, hit.astype(xfa.dtype),
                            preferred_element_type=jnp.float32,
                            precision=jax.lax.Precision.HIGHEST)
        scores = jnp.where(hit, -big, scores)

    cnt = acc[d:d + 1, :]                                  # (1, TQ) counts (== num_k w/o ties)
    out_ref[0, :, :] = (acc[:d, :] / cnt).astype(out_ref.dtype)


def _roundup(x: int, m: int) -> int:
    return -(-x // m) * m


def _vmem_estimate(n: int, d: int, tile_q: int, itemsize: int) -> int:
    """Rough per-grid-step VMEM footprint in bytes (padded to (8,128) tiles)."""
    dp1 = d + 1
    # resident inputs, double-buffered by the pipeline
    resident = 2 * (_roundup(dp1, 8) * _roundup(n, 128)
                    + _roundup(n, 8) * _roundup(dp1, 128)) * itemsize
    # large per-tile temporaries: live `scores` copies (f32) + hit mask
    temps = (3 * 4 + itemsize) * _roundup(n, 8) * _roundup(tile_q, 128)
    # output blocks, query slab, accumulator
    small = (2 * _roundup(d, 8) * _roundup(tile_q, 128) * itemsize
             + _roundup(dp1, 8) * _roundup(tile_q, 128) * (itemsize + 4))
    return resident + temps + small


def _pick_tile_q(n: int, d: int, itemsize: int, vmem_cap: int) -> int:
    """Largest query tile whose working set fits this generation's VMEM."""
    if n % 128 != 0:
        return n                                           # lane axis cannot be tiled
    budget = int(0.70 * vmem_cap)
    cands = [c for c in (1024, 512, 256, 128) if c <= n and n % c == 0]
    if n <= 1024 and (not cands or cands[0] != n):
        cands = [n] + cands
    for c in cands:
        if _vmem_estimate(n, d, c, itemsize) <= budget:
            return c
    return cands[-1]


def upsample(x, num_k: int = 2, tile_q=None):
    """x: (B, dims, N) channels-first (PyTorch layout). Returns (B, dims, 2N)."""
    # TODO(synk): the optional `pc` argument of the PyTorch forward (kNN over a
    # separate coordinate tensor) is not implemented; kNN runs on `x` itself.
    B, D, N = x.shape
    if not (1 <= num_k <= N - 1):
        raise ValueError(f"num_k={num_k} must be in [1, N-1] with N={N}")

    itemsize = jnp.dtype(x.dtype).itemsize
    try:                                                   # generation-aware budgets
        vmem_cap = int(pltpu.get_tpu_info().vmem_capacity_bytes)
    except Exception:
        vmem_cap = 64 << 20                                # conservative (v7x per-core)

    if tile_q is None:
        tile_q = _pick_tile_q(N, D, itemsize, vmem_cap)
    if N % tile_q != 0 or (tile_q != N and tile_q % 128 != 0):
        raise ValueError(f"tile_q={tile_q} must divide N={N} and be a multiple "
                         "of 128 (or equal to N)")

    # Hoisted query-invariant precompute (cheap one-time XLA ops):
    #   xfa = [x ; 1]   feeds the neighbour matmul (its ones row yields counts)
    #   xta = [2*x^T , -|x|^2]  turns the score computation into one matmul.
    dt = x.dtype
    xt = jnp.swapaxes(x, 1, 2)                                        # (B, N, D)
    sqk = jnp.sum(jnp.square(x.astype(jnp.float32)), axis=1)          # (B, N) f32
    xfa = jnp.concatenate([x, jnp.ones((B, 1, N), dt)], axis=1)       # (B, D+1, N)
    xta = jnp.concatenate([(2.0 * xt).astype(dt),
                           (-sqk[..., None]).astype(dt)], axis=-1)    # (B, N, D+1)

    kernel = functools.partial(_upsample_kernel, num_k=num_k, tile_q=tile_q)
    est = _vmem_estimate(N, D, tile_q, itemsize) + (2 << 20)
    vmem_limit = int(min(max(est, 32 << 20), int(0.85 * vmem_cap)))

    nbr = pl.pallas_call(
        kernel,
        out_shape=jax.ShapeDtypeStruct((B, D, N), dt),
        grid_spec=pltpu.PrefetchScalarGridSpec(
            num_scalar_prefetch=0,
            grid=(B, N // tile_q),
            in_specs=[
                # full point set (+ ones row), resident per batch
                pl.BlockSpec((1, D + 1, N), lambda b, q: (b, 0, 0)),
                # scaled transpose (+ negated squared norms), resident per batch
                pl.BlockSpec((1, N, D + 1), lambda b, q: (b, 0, 0)),
            ],
            out_specs=pl.BlockSpec((1, D, tile_q), lambda b, q: (b, 0, q)),
        ),
        compiler_params=pltpu.CompilerParams(
            dimension_semantics=("parallel", "parallel"),
            vmem_limit_bytes=vmem_limit),
    )(xfa, xta)                                            # (B, D, N)

    # cat([x, neighbour_mean], dim=-1): cheap XLA concat keeps kernel stores
    # full-block / lane-dense.
    return jnp.concatenate([x, nbr], axis=-1)              # (B, D, 2N)


def _upsample_ref(x, num_k: int = 2):
    """Pure-JAX reference mirroring the PyTorch forward exactly."""
    B, D, N = x.shape
    xt = jnp.transpose(x, (0, 2, 1))                       # (B, N, D)
    sq = jnp.sum(xt * xt, axis=-1, keepdims=True)          # (B, N, 1)
    inner = jnp.einsum("bnd,bmd->bnm", xt, xt,
                       precision=jax.lax.Precision.HIGHEST)
    negdist = 2.0 * inner - sq - jnp.swapaxes(sq, 1, 2)
    _, idx = jax.lax.top_k(negdist, num_k + 1)             # (B, N, k+1)
    idx = idx[:, :, 1:]                                    # drop self
    nbr = jnp.take_along_axis(xt[:, None, :, :],
                              idx[..., None], axis=2)      # (B, N, k, D)
    neighbor = jnp.mean(nbr - xt[:, :, None, :], axis=2)   # (B, N, D)
    x_up = jnp.concatenate([xt, neighbor + xt], axis=1)    # (B, 2N, D)
    return jnp.transpose(x_up, (0, 2, 1))                  # (B, D, 2N)


if __name__ == "__main__":
    key = jax.random.PRNGKey(0)

    # Small shape consistent with the module's (B, dims, N) point-cloud input.
    B, dims, N = 2, 4, 16
    x = jax.random.normal(key, (B, dims, N), dtype=jnp.float32)
    out = jax.block_until_ready(upsample(x, num_k=2))
    ref = _upsample_ref(x, num_k=2)
    assert out.shape == (B, dims, 2 * N), out.shape
    assert jnp.allclose(out, ref, atol=1e-5, rtol=1e-5), float(
        jnp.max(jnp.abs(out - ref)))

    # Exercise the tiled path (grid = (B, N // tile_q), queries sliced from the
    # resident block at a non-zero lane-aligned offset).
    key2 = jax.random.PRNGKey(1)
    B2, D2, N2 = 1, 3, 256
    x2 = jax.random.normal(key2, (B2, D2, N2), dtype=jnp.float32)
    out2 = jax.block_until_ready(upsample(x2, num_k=2, tile_q=128))
    ref2 = _upsample_ref(x2, num_k=2)
    assert out2.shape == (B2, D2, 2 * N2), out2.shape
    assert jnp.allclose(out2, ref2, atol=1e-5, rtol=1e-5), float(
        jnp.max(jnp.abs(out2 - ref2)))

    print("KERNEL_OK")
</pallas_src>

<mosaic_0001>
module attributes {stable_mosaic.version = 11 : i64} {
  func.func @_upsample_kernel(%arg0: i32, %arg1: i32, %arg2: memref<1x5x16xf32, #tpu.memory_space<vmem>>, %arg3: memref<1x16x5xf32, #tpu.memory_space<vmem>>, %arg4: memref<1x4x16xf32, #tpu.memory_space<vmem>>) attributes {dimension_semantics = [#tpu.dimension_semantics<parallel>, #tpu.dimension_semantics<parallel>], iteration_bounds = array<i64: 2, 1>, scalar_prefetch = 0 : i64, scratch_operands = 0 : i64, tpu.core_type = #tpu.core_type<tc>, window_params = [{transform_indices = @transform_0, window_bounds = array<i64: 1, 5, 16>}, {transform_indices = @transform_1, window_bounds = array<i64: 1, 16, 5>}, {transform_indices = @transform_2, window_bounds = array<i64: 1, 4, 16>}]} {
    %c0 = arith.constant 0 : index
    %c0_0 = arith.constant 0 : index
    %c0_1 = arith.constant 0 : index
    %0 = vector.load %arg2[%c0, %c0_0, %c0_1] : memref<1x5x16xf32, #tpu.memory_space<vmem>>, vector<1x5x16xf32>
    %1 = vector.shape_cast %0 : vector<1x5x16xf32> to vector<5x16xf32>
    %c0_2 = arith.constant 0 : index
    %c0_3 = arith.constant 0 : index
    %c0_4 = arith.constant 0 : index
    %2 = vector.load %arg3[%c0_2, %c0_3, %c0_4] : memref<1x16x5xf32, #tpu.memory_space<vmem>>, vector<1x16x5xf32>
    %3 = vector.shape_cast %2 : vector<1x16x5xf32> to vector<16x5xf32>
    %cst = arith.constant dense<0.000000e+00> : vector<16x16xf32>
    %4 = tpu.matmul %3, %1, %cst {dimension_numbers = #tpu.dot_dimension_numbers<[1], [0], [0], [1], [0, 0, 1, 1], [], []>, precision = #tpu.contract_precision<fp32>} : vector<16x5xf32>, vector<5x16xf32>, vector<16x16xf32> -> vector<16x16xf32>
    %5 = tpu.iota {dimensions = array<i32: 0>} : vector<16x16xi32>
    %6 = tpu.iota {dimensions = array<i32: 1>} : vector<16x16xi32>
    %c0_i32 = arith.constant 0 : i32
    %7 = vector.broadcast %c0_i32 : i32 to vector<16x16xi32>
    %8 = arith.addi %7, %6 : vector<16x16xi32>
    %9 = arith.cmpi eq, %5, %8 : vector<16x16xi32>
    %cst_5 = arith.constant 0.000000e+00 : f32
    %cst_6 = arith.constant 1.000000e+30 : f32
    %10 = arith.subf %cst_5, %cst_6 : f32
    %11 = vector.broadcast %10 : f32 to vector<16x16xf32>
    %12 = arith.select %9, %11, %4 : vector<16x16xi1>, vector<16x16xf32>
    %cst_7 = arith.constant 0.000000e+00 : f32
    %13 = vector.broadcast %cst_7 : f32 to vector<5x16xf32>
    %cst_8 = arith.constant dense<0xFF800000> : vector<16xf32>
    %14 = vector.multi_reduction <maximumf>, %12, %cst_8 [0] : vector<16x16xf32> to vector<16xf32>
    %15 = vector.shape_cast %14 : vector<16xf32> to vector<1x16xf32>
    %16 = vector.broadcast %15 : vector<1x16xf32> to vector<16x16xf32>
    %17 = arith.cmpf oge, %12, %16 : vector<16x16xf32>
    %18 = arith.extui %17 : vector<16x16xi1> to vector<16x16xi32>
    %19 = arith.sitofp %18 : vector<16x16xi32> to vector<16x16xf32>
    %cst_9 = arith.constant dense<0.000000e+00> : vector<5x16xf32>
    %20 = tpu.matmul %1, %19, %cst_9 {dimension_numbers = #tpu.dot_dimension_numbers<[1], [0], [0], [1], [0, 0, 1, 1], [], []>, precision = #tpu.contract_precision<fp32>} : vector<5x16xf32>, vector<16x16xf32>, vector<5x16xf32> -> vector<5x16xf32>
    %21 = arith.addf %13, %20 : vector<5x16xf32>
    %cst_10 = arith.constant 0.000000e+00 : f32
    %cst_11 = arith.constant 1.000000e+30 : f32
    %22 = arith.subf %cst_10, %cst_11 : f32
    %23 = vector.broadcast %22 : f32 to vector<16x16xf32>
    %24 = arith.select %17, %23, %12 : vector<16x16xi1>, vector<16x16xf32>
    %cst_12 = arith.constant dense<0xFF800000> : vector<16xf32>
    %25 = vector.multi_reduction <maximumf>, %24, %cst_12 [0] : vector<16x16xf32> to vector<16xf32>
    %26 = vector.shape_cast %25 : vector<16xf32> to vector<1x16xf32>
    %27 = vector.broadcast %26 : vector<1x16xf32> to vector<16x16xf32>
    %28 = arith.cmpf oge, %24, %27 : vector<16x16xf32>
    %29 = arith.extui %28 : vector<16x16xi1> to vector<16x16xi32>
    %30 = arith.sitofp %29 : vector<16x16xi32> to vector<16x16xf32>
    %cst_13 = arith.constant dense<0.000000e+00> : vector<5x16xf32>
    %31 = tpu.matmul %1, %30, %cst_13 {dimension_numbers = #tpu.dot_dimension_numbers<[1], [0], [0], [1], [0, 0, 1, 1], [], []>, precision = #tpu.contract_precision<fp32>} : vector<5x16xf32>, vector<16x16xf32>, vector<5x16xf32> -> vector<5x16xf32>
    %32 = arith.addf %21, %31 : vector<5x16xf32>
    %33 = vector.extract_strided_slice %32 {offsets = [4, 0], sizes = [1, 16], strides = [1, 1]} : vector<5x16xf32> to vector<1x16xf32>
    %34 = vector.extract_strided_slice %32 {offsets = [0, 0], sizes = [4, 16], strides = [1, 1]} : vector<5x16xf32> to vector<4x16xf32>
    %35 = vector.broadcast %33 : vector<1x16xf32> to vector<4x16xf32>
    %36 = arith.divf %34, %35 : vector<4x16xf32>
    %c0_14 = arith.constant 0 : index
    %c0_15 = arith.constant 0 : index
    %c0_16 = arith.constant 0 : index
    %37 = vector.load %arg4[%c0_14, %c0_15, %c0_16] : memref<1x4x16xf32, #tpu.memory_space<vmem>>, vector<1x4x16xf32>
    %38 = vector.shape_cast %37 : vector<1x4x16xf32> to vector<4x16xf32>
    %39 = vector.shape_cast %36 : vector<4x16xf32> to vector<1x4x16xf32>
    tpu.vector_store %arg4[%c0_14, %c0_15, %c0_16], %39 {strides = array<i32>} : memref<1x4x16xf32, #tpu.memory_space<vmem>>, vector<1x4x16xf32>,
    return
  }
  func.func @transform_0(%arg0: i32, %arg1: i32) -> (i32, i32, i32) {
    %c0_i32 = arith.constant 0 : i32
    %c0_i32_0 = arith.constant 0 : i32
    %c0_i32_1 = arith.constant 0 : i32
    return %arg0, %c0_i32, %c0_i32_0 : i32, i32, i32
  }
  func.func @transform_1(%arg0: i32, %arg1: i32) -> (i32, i32, i32) {
    %c0_i32 = arith.constant 0 : i32
    %c0_i32_0 = arith.constant 0 : i32
    %c0_i32_1 = arith.constant 0 : i32
    return %arg0, %c0_i32, %c0_i32_0 : i32, i32, i32
  }
  func.func @transform_2(%arg0: i32, %arg1: i32) -> (i32, i32, i32) {
    %c0_i32 = arith.constant 0 : i32
    %c0_i32_0 = arith.constant 0 : i32
    return %arg0, %c0_i32, %arg1 : i32, i32, i32
  }
}

</mosaic_0001>

<llo_original>
// kernel: tpu_custom_call.1
$region0: #{tpu_custom_call.1}
  #allocation0 [shape = 'u32[]', space=smem, size = 0x4, offset = 0x4, fixed_abs, tag = 'smem constant byte address 0x4 - core index']
  #allocation1 [shape = 'u32[144,128]{1,0:T(1,128)}', space=vmem, size = 0x12000, scoped, tag = 'internal scratch']
  %s0 = inlined_call_operand.vmem [shape: f32[2,5,16], index: 0, kind: input, shape index: {}]
  %s1 = inlined_call_operand.vmem [shape: f32[2,16,5], index: 1, kind: input, shape index: {}]
  %s2 = inlined_call_operand.hbm [shape: f32[2,4,16], index: 2, kind: output, shape index: {}]
  %s3 = sld [smem:[#allocation0]]
  $region41: #{tpu_custom_call.1} parent=0
    _
  %s5 = ssub.s32 1, %s3
  %s6 = scalar_select 0, %s5, %s3
  $region1: #{tpu_custom_call.1} parent=0
    #allocation2 [shape = 'u8[4096]{0}', space=vmem, size = 0x1000, scoped, tag = 'output window, operand 0']
    #allocation3 [shape = 's32[2]{0}', space=sflag, size = 0x8, scoped, tag = 'scoped memory for tpu_custom_call.1']
    %7 = vsyncpa [#allocation3], 0
    %s8 = scalar_lea.sflag [#allocation3], 1
    %9 = vsyncpa %s8, 0
    loop: start=0, step=1, limit=4
    $region2: #{tpu_custom_call.1} parent=1 // loop_pre_header
      _
    $region3: #{tpu_custom_call.1} parent=1 // loop_header
      %s11 = sphi 0, %s15
      %p12 = scmp.ge.s32.totalorder %s11, 4
      %s18 = sphi 0, %s30
      %s19 = sphi 0, %s26
      %s20 = sphi 0, %s18
      %s21 = sphi 0, %s19
      %s22 = sphi 0, %s20
      %s23 = sphi 0, %s21
      %s33 = sphi 0, %s35
      %s36 = sphi 0, %s33
      %s37 = sphi 0, %s36
      %s53 = sphi 0, %s37
      %s59 = sphi 0, %s61
      %s62 = sphi 0, %s59
      %s63 = sphi 0, %s62
      %s79 = sphi 0, %s63
      %s87 = sphi 0, %s89
      %s90 = sphi 0, %s87
      %s91 = sphi 0, %s90
      %s107 = sphi 0, %s91
    $region4: #{tpu_custom_call.1} parent=1 // loop_header_branch
      %14 = sbr.rel (%p12) target = $region8
    $region5: #{tpu_custom_call.1} parent=1 // loop_body
      %s16 = ssub.s32 %s11, 1
      %s17 = ssub.s32 %s11, 2
      %s24 = sadd.s32 1, %s19
      %p25 = scmp.ge.s32.totalorder %s24, 1
      %s26 = scalar_select %p25, 0, %s24
      %s27 = sadd.s32 1, %s18
      %s28 = scalar_select %p25, %s27, %s18
      %p29 = scmp.ge.s32.totalorder %s28, 2
      %s30 = scalar_select %p29, 0, %s28
      %s31 = ssub.s32 %s18, %s30
      %p32 = scmp.eq.s32.totalorder %s31, 0
      %s34 = sadd.s32 %s33, 1
      %s35 = scalar_select %p32, %s33, %s34
      %p38 = pneg %p32
      %p39 = scmp.eq.s32.totalorder %s11, 1
      %p40 = por %p38, %p39
      %p41 = scmp.ne.s32.totalorder %s33, %s36
      %p42 = scmp.eq.s32.totalorder %s11, 0
      %p43 = por %p41, %p42
      %p44 = scmp.ne.s32.totalorder %s33, %s36
      %p45 = scmp.eq.s32.totalorder %s16, 1
      %p46 = por %p44, %p45
      %p47 = scmp.ne.s32.totalorder %s36, %s37
      %p48 = scmp.eq.s32.totalorder %s16, 0
      %p49 = por %p47, %p48
      %p50 = scmp.ne.s32.totalorder %s36, %s37
      %p51 = scmp.eq.s32.totalorder %s17, 1
      %p52 = por %p50, %p51
      %p54 = scmp.ne.s32.totalorder %s37, %s53
      %p55 = scmp.eq.s32.totalorder %s17, 0
      %p56 = por %p54, %p55
      %s57 = ssub.s32 %s18, %s30
      %p58 = scmp.eq.s32.totalorder %s57, 0
      %s60 = sadd.s32 %s59, 1
      %s61 = scalar_select %p58, %s59, %s60
      %p64 = pneg %p58
      %p65 = scmp.eq.s32.totalorder %s11, 1
      %p66 = por %p64, %p65
      %p67 = scmp.ne.s32.totalorder %s59, %s62
      %p68 = scmp.eq.s32.totalorder %s11, 0
      %p69 = por %p67, %p68
      %p70 = scmp.ne.s32.totalorder %s59, %s62
      %p71 = scmp.eq.s32.totalorder %s16, 1
      %p72 = por %p70, %p71
      %p73 = scmp.ne.s32.totalorder %s62, %s63
      %p74 = scmp.eq.s32.totalorder %s16, 0
      %p75 = por %p73, %p74
      %p76 = scmp.ne.s32.totalorder %s62, %s63
      %p77 = scmp.eq.s32.totalorder %s17, 1
      %p78 = por %p76, %p77
      %p80 = scmp.ne.s32.totalorder %s63, %s79
      %p81 = scmp.eq.s32.totalorder %s17, 0
      %p82 = por %p80, %p81
      %s83 = ssub.s32 %s18, %s30
      %s84 = ssub.s32 %s19, %s26
      %s85 = sor.u32 %s83, %s84
      %p86 = scmp.eq.s32.totalorder %s85, 0
      %s88 = sadd.s32 %s87, 1
      %s89 = scalar_select %p86, %s87, %s88
      %p92 = pneg %p86
      %p93 = scmp.eq.s32.totalorder %s11, 1
      %p94 = por %p92, %p93
      %p95 = scmp.ne.s32.totalorder %s87, %s90
      %p96 = scmp.eq.s32.totalorder %s11, 0
      %p97 = por %p95, %p96
      %p98 = scmp.ne.s32.totalorder %s87, %s90
      %p99 = scmp.eq.s32.totalorder %s16, 1
      %p100 = por %p98, %p99
      %p101 = scmp.ne.s32.totalorder %s90, %s91
      %p102 = scmp.eq.s32.totalorder %s16, 0
      %p103 = por %p101, %p102
      %p104 = scmp.ne.s32.totalorder %s90, %s91
      %p105 = scmp.eq.s32.totalorder %s17, 1
      %p106 = por %p104, %p105
      %p108 = scmp.ne.s32.totalorder %s91, %s107
      %p109 = scmp.eq.s32.totalorder %s17, 0
      %p110 = por %p108, %p109
      %p111 = scmp.le.s32.totalorder 1, %s11
      %p112 = scmp.lt.s32.totalorder %s11, 3
      %p113 = pnand %p111, %p112
      %p114 = pneg %p113
      // Predicated region
      $region9: #{tpu_custom_call.1} parent=5 // pred_check
        _
      $region10: #{tpu_custom_call.1} parent=5 // pred_check_branch
        %116 = sbr.rel (%p113) target = $region12
      $region11: #{tpu_custom_call.1} parent=5 // pred_region
        %s117 = ssub.s32 %s11, 1
      $region12: #{tpu_custom_call.1} parent=5 // pred_fallthru
        _
      %p118 = scmp.lt.s32.totalorder %s11, 2
      // Predicated region
      $region13: #{tpu_custom_call.1} parent=5 // pred_check
        %p119 = pneg %p118
      $region14: #{tpu_custom_call.1} parent=5 // pred_check_branch
        %121 = sbr.rel (%p119) target = $region16
      $region15: #{tpu_custom_call.1} parent=5 // pred_region
        // Predicated region
        $region17: #{tpu_custom_call.1} parent=15 // pred_check
          %p122 = pneg %p43
        $region18: #{tpu_custom_call.1} parent=15 // pred_check_branch
          %124 = sbr.rel (%p122) target = $region20
        $region19: #{tpu_custom_call.1} parent=15 // pred_region
          %p125 = scmp.lt.s32.totalorder %s18, 1
          %s126 = scalar_select %p125, %s18, 1
          %s127 = smul.addr %s126, 8
          %s128 = scalar_lea.vmem %s0, %s127
        $region20: #{tpu_custom_call.1} parent=15 // pred_fallthru
          _
        // Predicated region
        $region21: #{tpu_custom_call.1} parent=15 // pred_check
          %p129 = pneg %p69
        $region22: #{tpu_custom_call.1} parent=15 // pred_check_branch
          %131 = sbr.rel (%p129) target = $region24
        $region23: #{tpu_custom_call.1} parent=15 // pred_region
          %p132 = scmp.lt.s32.totalorder %s18, 1
          %s133 = scalar_select %p132, %s18, 1
          %s134 = smul.addr %s133, 2
          %s135 = smul.addr %s134, 8
          %s136 = scalar_lea.vmem %s1, %s135
        $region24: #{tpu_custom_call.1} parent=15 // pred_fallthru
          _
      $region16: #{tpu_custom_call.1} parent=5 // pred_fallthru
        _
      %p137 = scmp.le.s32.totalorder 1, %s11
      %p138 = scmp.lt.s32.totalorder %s11, 3
      %p139 = pnand %p137, %p138
      %p140 = pneg %p139
      // Predicated region
      $region25: #{tpu_custom_call.1} parent=5 // pred_check
        _
      $region26: #{tpu_custom_call.1} parent=5 // pred_check_branch
        %142 = sbr.rel (%p139) target = $region28
      $region27: #{tpu_custom_call.1} parent=5 // pred_region
        %s143 = ssub.s32 %s11, 1
        %p144 = scmp.lt.s32.totalorder %s20, 1
        %s145 = scalar_select %p144, %s20, 1
        %s146 = smul.addr %s145, 8
        %s147 = scalar_lea.vmem %s0, %s146
        %p148 = pneg %p49
        %p149 = pneg %p46
        %p150 = scmp.lt.s32.totalorder %s20, 1
        %s151 = scalar_select %p150, %s20, 1
        %s152 = smul.addr %s151, 2
        %s153 = smul.addr %s152, 8
        %s154 = scalar_lea.vmem %s1, %s153
        %p155 = pneg %p75
        %p156 = pneg %p72
        %p157 = pneg %p103
        %p158 = pneg %p100
        %s159 = sand.u32 %s90, 1
        %s160 = scalar_lea.sflag [#allocation3], %s159
        %s161 = sand.u32 %s90, 1
        %s162 = smul.addr %s161, 4
        %s163 = scalar_lea.vmem [#allocation2], %s162
        %p164 = scmp.lt.s32.totalorder %s20, 1
        %s165 = scalar_select %p164, %s20, 1
        %s166 = smul.addr %s165, 8
        %s167 = scalar_lea.vmem %s0, %s166
        %p168 = scmp.lt.s32.totalorder %s20, 1
        %s169 = scalar_select %p168, %s20, 1
        %s170 = smul.addr %s169, 2
        %s171 = smul.addr %s170, 8
        %s172 = scalar_lea.vmem %s1, %s171
        %v173 = vld [vmem:[%s167] sm:$0x1f]
        %v174 = vld [vmem:[%s172] sm:$0xff]
        %v175 = vld [vmem:[%s172 + $0x8] sm:$0xff]
        %vm176 = vcmask 39936
        %v178 = vsel %vm176, %v174, 0
        %v181 = vsel %vm176, %v175, 0
        %vm183 = vcmask 1044480
        %v185 = vsel %vm183, %v173, 0
        %187 = vmatprep.subr.mxu0 0.0
        %v188 = vand.u32 %v185, 4294901760
        %189 = vmatpush1.msra.mxu0 %v188
        %190 = vmatprep.subr.mxu0 0.0
        %191 = vmatpush1.msra.mxu0 0.0
        %192 = vmatprep.subr.mxu0 0.0
        %193 = vmatpush1.msra.mxu0 0.0
        %194 = vmatprep.subr.mxu0 0.0
        %195 = vmatpush1.msra.mxu0 0.0
        %196 = vmatprep.subr.mxu0 0.0
        %197 = vmatpush1.msra.mxu0 0.0
        %198 = vmatprep.subr.mxu0 0.0
        %199 = vmatpush1.msra.mxu0 0.0
        %200 = vmatprep.subr.mxu0 0.0
        %201 = vmatpush1.msra.mxu0 0.0
        %202 = vmatprep.subr.mxu0 0.0
        %203 = vmatpush1.msra.mxu0 0.0
        %204 = vmatprep.subr.mxu0 0.0
        %205 = vmatpush1.msra.mxu0 0.0
        %206 = vmatprep.subr.mxu0 0.0
        %207 = vmatpush1.msra.mxu0 0.0
        %208 = vmatprep.subr.mxu0 0.0
        %209 = vmatpush1.msra.mxu0 0.0
        %210 = vmatprep.subr.mxu0 0.0
        %211 = vmatpush1.msra.mxu0 0.0
        %212 = vmatprep.subr.mxu0 0.0
        %213 = vmatpush1.msra.mxu0 0.0
        %214 = vmatprep.subr.mxu0 0.0
        %215 = vmatpush1.msra.mxu0 0.0
        %216 = vmatprep.subr.mxu0 0.0
        %217 = vmatpush1.msra.mxu0 0.0
        %218 = vmatprep.subr.mxu0 0.0
        %219 = vmatpush1.msra.mxu0 0.0
        %220 = vmatprep.subr.mxu0 0.0
        %221 = vmatpush1.msra.mxu0 0.0
        %222 = vmatprep.subr.mxu0 0.0
        %223 = vmatpush1.msra.mxu0 0.0
        %224 = vmatprep.subr.mxu0 0.0
        %225 = vmatpush1.msra.mxu0 0.0
        %226 = vmatprep.subr.mxu0 0.0
        %227 = vmatpush1.msra.mxu0 0.0
        %228 = vmatprep.subr.mxu0 0.0
        %229 = vmatpush1.msra.mxu0 0.0
        %230 = vmatprep.subr.mxu0 0.0
        %231 = vmatpush1.msra.mxu0 0.0
        %232 = vmatprep.subr.mxu0 0.0
        %233 = vmatpush1.msra.mxu0 0.0
        %234 = vmatprep.subr.mxu0 0.0
        %235 = vmatpush1.msra.mxu0 0.0
        %236 = vmatprep.subr.mxu0 0.0
        %237 = vmatpush1.msra.mxu0 0.0
        %238 = vmatprep.subr.mxu0 0.0
        %239 = vmatpush1.msra.mxu0 0.0
        %240 = vmatprep.subr.mxu0 0.0
        %241 = vmatpush1.msra.mxu0 0.0
        %242 = vmatprep.subr.mxu0 0.0
        %243 = vmatpush1.msra.mxu0 0.0
        %244 = vmatprep.subr.mxu0 0.0
        %245 = vmatpush1.msra.mxu0 0.0
        %246 = vmatprep.subr.mxu0 0.0
        %247 = vmatpush1.msra.mxu0 0.0
        %248 = vmatprep.subr.mxu0 0.0
        %249 = vmatpush1.msra.mxu0 0.0
        %250 = vmatprep.subr.mxu0 0.0
        %251 = vmatpush1.msra.mxu0 0.0
        %252 = vmatprep.mubr.f32.mxu0 0.0
        %v253 = vand.u32 %v178, 4294901760
        %v254 = vsub.f32 %v178, %v253
        %v255 = vand.u32 %v254, 4294901760
        %v256 = vsub.f32 %v254, %v255
        %v257 = vand.u32 %v256, 4294901760
        %258 = vmatmul.mubr.f32.gmra.mrb[0].mxu0 %v257
        %v259 = vpop.f32.mrb[0].mxu0
        %v260 = vadd.f32 0.0, %v259
        %v261 = vpop.f32.mrb[0].mxu0
        %262 = vmatprep.mubr.f32.mxu0 0.0
        %v263 = vand.u32 %v181, 4294901760
        %v264 = vsub.f32 %v181, %v263
        %v265 = vand.u32 %v264, 4294901760
        %v266 = vsub.f32 %v264, %v265
        %v267 = vand.u32 %v266, 4294901760
        %268 = vmatmul.mubr.f32.gmra.mrb[0].mxu0 %v267
        %v269 = vpop.f32.mrb[0].mxu0
        %v270 = vadd.f32 0.0, %v269
        %v271 = vpop.f32.mrb[0].mxu0
        %272 = vdwg.mxu0
        %273 = vmatprep.subr.mxu0 0.0
        %v274 = vand.u32 %v185, 4294901760
        %v275 = vsub.f32 %v185, %v274
        %v276 = vand.u32 %v275, 4294901760
        %v277 = vsub.f32 %v275, %v276
        %v278 = vand.u32 %v277, 4294901760
        %279 = vmatpush1.msra.mxu0 %v278
        %280 = vmatprep.subr.mxu0 0.0
        %281 = vmatpush1.msra.mxu0 0.0
        %282 = vmatprep.subr.mxu0 0.0
        %283 = vmatpush1.msra.mxu0 0.0
        %284 = vmatprep.subr.mxu0 0.0
        %285 = vmatpush1.msra.mxu0 0.0
        %286 = vmatprep.subr.mxu0 0.0
        %287 = vmatpush1.msra.mxu0 0.0
        %288 = vmatprep.subr.mxu0 0.0
        %289 = vmatpush1.msra.mxu0 0.0
        %290 = vmatprep.subr.mxu0 0.0
        %291 = vmatpush1.msra.mxu0 0.0
        %292 = vmatprep.subr.mxu0 0.0
        %293 = vmatpush1.msra.mxu0 0.0
        %294 = vmatprep.subr.mxu0 0.0
        %295 = vmatpush1.msra.mxu0 0.0
        %296 = vmatprep.subr.mxu0 0.0
        %297 = vmatpush1.msra.mxu0 0.0
        %298 = vmatprep.subr.mxu0 0.0
        %299 = vmatpush1.msra.mxu0 0.0
        %300 = vmatprep.subr.mxu0 0.0
        %301 = vmatpush1.msra.mxu0 0.0
        %302 = vmatprep.subr.mxu0 0.0
        %303 = vmatpush1.msra.mxu0 0.0
        %304 = vmatprep.subr.mxu0 0.0
        %305 = vmatpush1.msra.mxu0 0.0
        %306 = vmatprep.subr.mxu0 0.0
        %307 = vmatpush1.msra.mxu0 0.0
        %308 = vmatprep.subr.mxu0 0.0
        %309 = vmatpush1.msra.mxu0 0.0
        %310 = vmatprep.subr.mxu0 0.0
        %311 = vmatpush1.msra.mxu0 0.0
        %312 = vmatprep.subr.mxu0 0.0
        %313 = vmatpush1.msra.mxu0 0.0
        %314 = vmatprep.subr.mxu0 0.0
        %315 = vmatpush1.msra.mxu0 0.0
        %316 = vmatprep.subr.mxu0 0.0
        %317 = vmatpush1.msra.mxu0 0.0
        %318 = vmatprep.subr.mxu0 0.0
        %319 = vmatpush1.msra.mxu0 0.0
        %320 = vmatprep.subr.mxu0 0.0
        %321 = vmatpush1.msra.mxu0 0.0
        %322 = vmatprep.subr.mxu0 0.0
        %323 = vmatpush1.msra.mxu0 0.0
        %324 = vmatprep.subr.mxu0 0.0
        %325 = vmatpush1.msra.mxu0 0.0
        %326 = vmatprep.subr.mxu0 0.0
        %327 = vmatpush1.msra.mxu0 0.0
        %328 = vmatprep.subr.mxu0 0.0
        %329 = vmatpush1.msra.mxu0 0.0
        %330 = vmatprep.subr.mxu0 0.0
        %331 = vmatpush1.msra.mxu0 0.0
        %332 = vmatprep.subr.mxu0 0.0
        %333 = vmatpush1.msra.mxu0 0.0
        %334 = vmatprep.subr.mxu0 0.0
        %335 = vmatpush1.msra.mxu0 0.0
        %336 = vmatprep.subr.mxu0 0.0
        %337 = vmatpush1.msra.mxu0 0.0
        %338 = vmatprep.subr.mxu0 0.0
        %339 = vmatpush1.msra.mxu0 0.0
        %340 = vmatprep.subr.mxu0 0.0
        %341 = vmatpush1.msra.mxu0 0.0
        %342 = vmatprep.mubr.f32.mxu0 0.0
        %v343 = vand.u32 %v178, 4294901760
        %344 = vmatmul.mubr.f32.gmra.mrb[0].mxu0 %v343
        %v345 = vpop.f32.mrb[0].mxu0
        %v346 = vadd.f32 %v260, %v345
        %v347 = vpop.f32.mrb[0].mxu0
        %348 = vmatprep.mubr.f32.mxu0 0.0
        %v349 = vand.u32 %v181, 4294901760
        %350 = vmatmul.mubr.f32.gmra.mrb[0].mxu0 %v349
        %v351 = vpop.f32.mrb[0].mxu0
        %v352 = vadd.f32 %v270, %v351
        %v353 = vpop.f32.mrb[0].mxu0
        %354 = vdwg.mxu0
        %355 = vmatprep.subr.mxu0 0.0
        %v356 = vand.u32 %v185, 4294901760
        %v357 = vsub.f32 %v185, %v356
        %358 = vmatpush1.msra.mxu0 %v357
        %359 = vmatprep.subr.mxu0 0.0
        %360 = vmatpush1.msra.mxu0 0.0
        %361 = vmatprep.subr.mxu0 0.0
        %362 = vmatpush1.msra.mxu0 0.0
        %363 = vmatprep.subr.mxu0 0.0
        %364 = vmatpush1.msra.mxu0 0.0
        %365 = vmatprep.subr.mxu0 0.0
        %366 = vmatpush1.msra.mxu0 0.0
        %367 = vmatprep.subr.mxu0 0.0
        %368 = vmatpush1.msra.mxu0 0.0
        %369 = vmatprep.subr.mxu0 0.0
        %370 = vmatpush1.msra.mxu0 0.0
        %371 = vmatprep.subr.mxu0 0.0
        %372 = vmatpush1.msra.mxu0 0.0
        %373 = vmatprep.subr.mxu0 0.0
        %374 = vmatpush1.msra.mxu0 0.0
        %375 = vmatprep.subr.mxu0 0.0
        %376 = vmatpush1.msra.mxu0 0.0
        %377 = vmatprep.subr.mxu0 0.0
        %378 = vmatpush1.msra.mxu0 0.0
        %379 = vmatprep.subr.mxu0 0.0
        %380 = vmatpush1.msra.mxu0 0.0
        %381 = vmatprep.subr.mxu0 0.0
        %382 = vmatpush1.msra.mxu0 0.0
        %383 = vmatprep.subr.mxu0 0.0
        %384 = vmatpush1.msra.mxu0 0.0
        %385 = vmatprep.subr.mxu0 0.0
        %386 = vmatpush1.msra.mxu0 0.0
        %387 = vmatprep.subr.mxu0 0.0
        %388 = vmatpush1.msra.mxu0 0.0
        %389 = vmatprep.subr.mxu0 0.0
        %390 = vmatpush1.msra.mxu0 0.0
        %391 = vmatprep.subr.mxu0 0.0
        %392 = vmatpush1.msra.mxu0 0.0
        %393 = vmatprep.subr.mxu0 0.0
        %394 = vmatpush1.msra.mxu0 0.0
        %395 = vmatprep.subr.mxu0 0.0
        %396 = vmatpush1.msra.mxu0 0.0
        %397 = vmatprep.subr.mxu0 0.0
        %398 = vmatpush1.msra.mxu0 0.0
        %399 = vmatprep.subr.mxu0 0.0
        %400 = vmatpush1.msra.mxu0 0.0
        %401 = vmatprep.subr.mxu0 0.0
        %402 = vmatpush1.msra.mxu0 0.0
        %403 = vmatprep.subr.mxu0 0.0
        %404 = vmatpush1.msra.mxu0 0.0
        %405 = vmatprep.subr.mxu0 0.0
        %406 = vmatpush1.msra.mxu0 0.0
        %407 = vmatprep.subr.mxu0 0.0
        %408 = vmatpush1.msra.mxu0 0.0
        %409 = vmatprep.subr.mxu0 0.0
        %410 = vmatpush1.msra.mxu0 0.0
        %411 = vmatprep.subr.mxu0 0.0
        %412 = vmatpush1.msra.mxu0 0.0
        %413 = vmatprep.subr.mxu0 0.0
        %414 = vmatpush1.msra.mxu0 0.0
        %415 = vmatprep.subr.mxu0 0.0
        %416 = vmatpush1.msra.mxu0 0.0
        %417 = vmatprep.subr.mxu0 0.0
        %418 = vmatpush1.msra.mxu0 0.0
        %419 = vmatprep.subr.mxu0 0.0
        %420 = vmatpush1.msra.mxu0 0.0
        %421 = vmatprep.mubr.f32.mxu0 0.0
        %v422 = vand.u32 %v178, 4294901760
        %v423 = vsub.f32 %v178, %v422
        %424 = vmatmul.mubr.f32.gmra.mrb[0].mxu0 %v423
        %v425 = vpop.f32.mrb[0].mxu0
        %v426 = vadd.f32 %v346, %v425
        %v427 = vpop.f32.mrb[0].mxu0
        %428 = vmatprep.mubr.f32.mxu0 0.0
        %v429 = vand.u32 %v181, 4294901760
        %v430 = vsub.f32 %v181, %v429
        %431 = vmatmul.mubr.f32.gmra.mrb[0].mxu0 %v430
        %v432 = vpop.f32.mrb[0].mxu0
        %v433 = vadd.f32 %v352, %v432
        %v434 = vpop.f32.mrb[0].mxu0
        %435 = vdwg.mxu0
        %436 = vmatprep.subr.mxu0 0.0
        %v437 = vand.u32 %v185, 4294901760
        %438 = vmatpush1.msra.mxu0 %v437
        %439 = vmatprep.subr.mxu0 0.0
        %440 = vmatpush1.msra.mxu0 0.0
        %441 = vmatprep.subr.mxu0 0.0
        %442 = vmatpush1.msra.mxu0 0.0
        %443 = vmatprep.subr.mxu0 0.0
        %444 = vmatpush1.msra.mxu0 0.0
        %445 = vmatprep.subr.mxu0 0.0
        %446 = vmatpush1.msra.mxu0 0.0
        %447 = vmatprep.subr.mxu0 0.0
        %448 = vmatpush1.msra.mxu0 0.0
        %449 = vmatprep.subr.mxu0 0.0
        %450 = vmatpush1.msra.mxu0 0.0
        %451 = vmatprep.subr.mxu0 0.0
        %452 = vmatpush1.msra.mxu0 0.0
        %453 = vmatprep.subr.mxu0 0.0
        %454 = vmatpush1.msra.mxu0 0.0
        %455 = vmatprep.subr.mxu0 0.0
        %456 = vmatpush1.msra.mxu0 0.0
        %457 = vmatprep.subr.mxu0 0.0
        %458 = vmatpush1.msra.mxu0 0.0
        %459 = vmatprep.subr.mxu0 0.0
        %460 = vmatpush1.msra.mxu0 0.0
        %461 = vmatprep.subr.mxu0 0.0
        %462 = vmatpush1.msra.mxu0 0.0
        %463 = vmatprep.subr.mxu0 0.0
        %464 = vmatpush1.msra.mxu0 0.0
        %465 = vmatprep.subr.mxu0 0.0
        %466 = vmatpush1.msra.mxu0 0.0
        %467 = vmatprep.subr.mxu0 0.0
        %468 = vmatpush1.msra.mxu0 0.0
        %469 = vmatprep.subr.mxu0 0.0
        %470 = vmatpush1.msra.mxu0 0.0
        %471 = vmatprep.subr.mxu0 0.0
        %472 = vmatpush1.msra.mxu0 0.0
        %473 = vmatprep.subr.mxu0 0.0
        %474 = vmatpush1.msra.mxu0 0.0
        %475 = vmatprep.subr.mxu0 0.0
        %476 = vmatpush1.msra.mxu0 0.0
        %477 = vmatprep.subr.mxu0 0.0
        %478 = vmatpush1.msra.mxu0 0.0
        %479 = vmatprep.subr.mxu0 0.0
        %480 = vmatpush1.msra.mxu0 0.0
        %481 = vmatprep.subr.mxu0 0.0
        %482 = vmatpush1.msra.mxu0 0.0
        %483 = vmatprep.subr.mxu0 0.0
        %484 = vmatpush1.msra.mxu0 0.0
        %485 = vmatprep.subr.mxu0 0.0
        %486 = vmatpush1.msra.mxu0 0.0
        %487 = vmatprep.subr.mxu0 0.0
        %488 = vmatpush1.msra.mxu0 0.0
        %489 = vmatprep.subr.mxu0 0.0
        %490 = vmatpush1.msra.mxu0 0.0
        %491 = vmatprep.subr.mxu0 0.0
        %492 = vmatpush1.msra.mxu0 0.0
        %493 = vmatprep.subr.mxu0 0.0
        %494 = vmatpush1.msra.mxu0 0.0
        %495 = vmatprep.subr.mxu0 0.0
        %496 = vmatpush1.msra.mxu0 0.0
        %497 = vmatprep.subr.mxu0 0.0
        %498 = vmatpush1.msra.mxu0 0.0
        %499 = vmatprep.subr.mxu0 0.0
        %500 = vmatpush1.msra.mxu0 0.0
        %501 = vmatprep.mubr.f32.mxu0 0.0
        %v502 = vand.u32 %v178, 4294901760
        %v503 = vsub.f32 %v178, %v502
        %v504 = vand.u32 %v503, 4294901760
        %505 = vmatmul.mubr.f32.gmra.mrb[0].mxu0 %v504
        %v506 = vpop.f32.mrb[0].mxu0
        %v507 = vadd.f32 %v426, %v506
        %v508 = vpop.f32.mrb[0].mxu0
        %509 = vmatprep.mubr.f32.mxu0 0.0
        %v510 = vand.u32 %v181, 4294901760
        %v511 = vsub.f32 %v181, %v510
        %v512 = vand.u32 %v511, 4294901760
        %513 = vmatmul.mubr.f32.gmra.mrb[0].mxu0 %v512
        %v514 = vpop.f32.mrb[0].mxu0
        %v515 = vadd.f32 %v433, %v514
        %v516 = vpop.f32.mrb[0].mxu0
        %517 = vdwg.mxu0
        %518 = vmatprep.subr.mxu0 0.0
        %v519 = vand.u32 %v185, 4294901760
        %v520 = vsub.f32 %v185, %v519
        %v521 = vand.u32 %v520, 4294901760
        %522 = vmatpush1.msra.mxu0 %v521
        %523 = vmatprep.subr.mxu0 0.0
        %524 = vmatpush1.msra.mxu0 0.0
        %525 = vmatprep.subr.mxu0 0.0
        %526 = vmatpush1.msra.mxu0 0.0
        %527 = vmatprep.subr.mxu0 0.0
        %528 = vmatpush1.msra.mxu0 0.0
        %529 = vmatprep.subr.mxu0 0.0
        %530 = vmatpush1.msra.mxu0 0.0
        %531 = vmatprep.subr.mxu0 0.0
        %532 = vmatpush1.msra.mxu0 0.0
        %533 = vmatprep.subr.mxu0 0.0
        %534 = vmatpush1.msra.mxu0 0.0
        %535 = vmatprep.subr.mxu0 0.0
        %536 = vmatpush1.msra.mxu0 0.0
        %537 = vmatprep.subr.mxu0 0.0
        %538 = vmatpush1.msra.mxu0 0.0
        %539 = vmatprep.subr.mxu0 0.0
        %540 = vmatpush1.msra.mxu0 0.0
        %541 = vmatprep.subr.mxu0 0.0
        %542 = vmatpush1.msra.mxu0 0.0
        %543 = vmatprep.subr.mxu0 0.0
        %544 = vmatpush1.msra.mxu0 0.0
        %545 = vmatprep.subr.mxu0 0.0
        %546 = vmatpush1.msra.mxu0 0.0
        %547 = vmatprep.subr.mxu0 0.0
        %548 = vmatpush1.msra.mxu0 0.0
        %549 = vmatprep.subr.mxu0 0.0
        %550 = vmatpush1.msra.mxu0 0.0
        %551 = vmatprep.subr.mxu0 0.0
        %552 = vmatpush1.msra.mxu0 0.0
        %553 = vmatprep.subr.mxu0 0.0
        %554 = vmatpush1.msra.mxu0 0.0
        %555 = vmatprep.subr.mxu0 0.0
        %556 = vmatpush1.msra.mxu0 0.0
        %557 = vmatprep.subr.mxu0 0.0
        %558 = vmatpush1.msra.mxu0 0.0
        %559 = vmatprep.subr.mxu0 0.0
        %560 = vmatpush1.msra.mxu0 0.0
        %561 = vmatprep.subr.mxu0 0.0
        %562 = vmatpush1.msra.mxu0 0.0
        %563 = vmatprep.subr.mxu0 0.0
        %564 = vmatpush1.msra.mxu0 0.0
        %565 = vmatprep.subr.mxu0 0.0
        %566 = vmatpush1.msra.mxu0 0.0
        %567 = vmatprep.subr.mxu0 0.0
        %568 = vmatpush1.msra.mxu0 0.0
        %569 = vmatprep.subr.mxu0 0.0
        %570 = vmatpush1.msra.mxu0 0.0
        %571 = vmatprep.subr.mxu0 0.0
        %572 = vmatpush1.msra.mxu0 0.0
        %573 = vmatprep.subr.mxu0 0.0
        %574 = vmatpush1.msra.mxu0 0.0
        %575 = vmatprep.subr.mxu0 0.0
        %576 = vmatpush1.msra.mxu0 0.0
        %577 = vmatprep.subr.mxu0 0.0
        %578 = vmatpush1.msra.mxu0 0.0
        %579 = vmatprep.subr.mxu0 0.0
        %580 = vmatpush1.msra.mxu0 0.0
        %581 = vmatprep.subr.mxu0 0.0
        %582 = vmatpush1.msra.mxu0 0.0
        %583 = vmatprep.subr.mxu0 0.0
        %584 = vmatpush1.msra.mxu0 0.0
        %585 = vmatprep.mubr.f32.mxu0 0.0
        %v586 = vand.u32 %v178, 4294901760
        %587 = vmatmul.mubr.f32.gmra.mrb[0].mxu0 %v586
        %v588 = vpop.f32.mrb[0].mxu0
        %v589 = vadd.f32 %v507, %v588
        %v590 = vpop.f32.mrb[0].mxu0
        %591 = vmatprep.mubr.f32.mxu0 0.0
        %v592 = vand.u32 %v181, 4294901760
        %593 = vmatmul.mubr.f32.gmra.mrb[0].mxu0 %v592
        %v594 = vpop.f32.mrb[0].mxu0
        %v595 = vadd.f32 %v515, %v594
        %v596 = vpop.f32.mrb[0].mxu0
        %597 = vdwg.mxu0
        %598 = vmatprep.subr.mxu0 0.0
        %v599 = vand.u32 %v185, 4294901760
        %600 = vmatpush1.msra.mxu0 %v599
        %601 = vmatprep.subr.mxu0 0.0
        %602 = vmatpush1.msra.mxu0 0.0
        %603 = vmatprep.subr.mxu0 0.0
        %604 = vmatpush1.msra.mxu0 0.0
        %605 = vmatprep.subr.mxu0 0.0
        %606 = vmatpush1.msra.mxu0 0.0
        %607 = vmatprep.subr.mxu0 0.0
        %608 = vmatpush1.msra.mxu0 0.0
        %609 = vmatprep.subr.mxu0 0.0
        %610 = vmatpush1.msra.mxu0 0.0
        %611 = vmatprep.subr.mxu0 0.0
        %612 = vmatpush1.msra.mxu0 0.0
        %613 = vmatprep.subr.mxu0 0.0
        %614 = vmatpush1.msra.mxu0 0.0
        %615 = vmatprep.subr.mxu0 0.0
        %616 = vmatpush1.msra.mxu0 0.0
        %617 = vmatprep.subr.mxu0 0.0
        %618 = vmatpush1.msra.mxu0 0.0
        %619 = vmatprep.subr.mxu0 0.0
        %620 = vmatpush1.msra.mxu0 0.0
        %621 = vmatprep.subr.mxu0 0.0
        %622 = vmatpush1.msra.mxu0 0.0
        %623 = vmatprep.subr.mxu0 0.0
        %624 = vmatpush1.msra.mxu0 0.0
        %625 = vmatprep.subr.mxu0 0.0
        %626 = vmatpush1.msra.mxu0 0.0
        %627 = vmatprep.subr.mxu0 0.0
        %628 = vmatpush1.msra.mxu0 0.0
        %629 = vmatprep.subr.mxu0 0.0
        %630 = vmatpush1.msra.mxu0 0.0
        %631 = vmatprep.subr.mxu0 0.0
        %632 = vmatpush1.msra.mxu0 0.0
        %633 = vmatprep.subr.mxu0 0.0
        %634 = vmatpush1.msra.mxu0 0.0
        %635 = vmatprep.subr.mxu0 0.0
        %636 = vmatpush1.msra.mxu0 0.0
        %637 = vmatprep.subr.mxu0 0.0
        %638 = vmatpush1.msra.mxu0 0.0
        %639 = vmatprep.subr.mxu0 0.0
        %640 = vmatpush1.msra.mxu0 0.0
        %641 = vmatprep.subr.mxu0 0.0
        %642 = vmatpush1.msra.mxu0 0.0
        %643 = vmatprep.subr.mxu0 0.0
        %644 = vmatpush1.msra.mxu0 0.0
        %645 = vmatprep.subr.mxu0 0.0
        %646 = vmatpush1.msra.mxu0 0.0
        %647 = vmatprep.subr.mxu0 0.0
        %648 = vmatpush1.msra.mxu0 0.0
        %649 = vmatprep.subr.mxu0 0.0
        %650 = vmatpush1.msra.mxu0 0.0
        %651 = vmatprep.subr.mxu0 0.0
        %652 = vmatpush1.msra.mxu0 0.0
        %653 = vmatprep.subr.mxu0 0.0
        %654 = vmatpush1.msra.mxu0 0.0
        %655 = vmatprep.subr.mxu0 0.0
        %656 = vmatpush1.msra.mxu0 0.0
        %657 = vmatprep.subr.mxu0 0.0
        %658 = vmatpush1.msra.mxu0 0.0
        %659 = vmatprep.subr.mxu0 0.0
        %660 = vmatpush1.msra.mxu0 0.0
        %661 = vmatprep.subr.mxu0 0.0
        %662 = vmatpush1.msra.mxu0 0.0
        %663 = vmatprep.mubr.f32.mxu0 0.0
        %v664 = vand.u32 %v178, 4294901760
        %665 = vmatmul.mubr.f32.gmra.mrb[0].mxu0 %v664
        %v666 = vpop.f32.mrb[0].mxu0
        %v667 = vadd.f32 %v589, %v666
        %v668 = vpop.f32.mrb[0].mxu0
        %669 = vmatprep.mubr.f32.mxu0 0.0
        %v670 = vand.u32 %v181, 4294901760
        %671 = vmatmul.mubr.f32.gmra.mrb[0].mxu0 %v670
        %v672 = vpop.f32.mrb[0].mxu0
        %v673 = vadd.f32 %v595, %v672
        %v674 = vpop.f32.mrb[0].mxu0
        %675 = vdwg.mxu0
        %v676 = vlaneseq
        %v677 = vshrl.u32 %v676, 7
        %v678 = vadd.s32 %v677, 8
        %v679 = vlaneseq
        %v680 = vand.u32 %v679, 127
        %vm681 = vcmp.eq.s32.totalorder %v677, %v680
        %vm682 = vcmp.eq.s32.totalorder %v678, %v680
        %v683 = vsel %vm681, -1e+30, %v667
        %v684 = vsel %vm682, -1e+30, %v673
        %vm685 = vcmask 130048
        %v686 = vsel %vm685, %v683, -inf
        %v687 = vsel %vm685, %v684, -inf
        %v688 = vmax.f32 %v686, %v687
        %v689 = vrot.slane %v688, 4
        %v690 = vmax.f32 %v688, %v689
        %v691 = vrot.slane %v690, 2
        %v692 = vmax.f32 %v690, %v691
        %v693 = vrot.slane %v692, 1
        %v694 = vmax.f32 %v692, %v693
        %vm695 = vcmp.ge.f32.partialorder %v683, %v694
        %vm696 = vcmp.ge.f32.partialorder %v684, %v694
        %v697 = vsel %vm695, 1, 0
        %v698 = vsel %vm696, 1, 0
        %v699 = vcvt.s32.f32 %v697
        %v700 = vcvt.s32.f32 %v698
        %v701 = vsel %vm695, -1e+30, %v683
        %v702 = vsel %vm696, -1e+30, %v684
        %v703 = vsel %vm685, %v701, -inf
        %v704 = vsel %vm685, %v702, -inf
        %v705 = vmax.f32 %v703, %v704
        %v706 = vrot.slane %v705, 4
        %v707 = vmax.f32 %v705, %v706
        %v708 = vrot.slane %v707, 2
        %v709 = vmax.f32 %v707, %v708
        %v710 = vrot.slane %v709, 1
        %v711 = vmax.f32 %v709, %v710
        %vm712 = vcmp.ge.f32.partialorder %v701, %v711
        %vm713 = vcmp.ge.f32.partialorder %v702, %v711
        %v714 = vsel %vm712, 1, 0
        %v715 = vsel %vm713, 1, 0
        %v716 = vcvt.s32.f32 %v714
        %v717 = vcvt.s32.f32 %v715
        %v718 = vsel %vm685, %v173, 0
        %720 = vmatprep.subr.mxu0 0.0
        %v721 = vand.u32 %v716, 4294901760
        %722 = vmatpush1.msra.mxu0 %v721
        %723 = vmatprep.subr.mxu0 0.0
        %v724 = vand.u32 %v717, 4294901760
        %725 = vmatpush1.msra.mxu0 %v724
        %726 = vmatprep.subr.mxu0 0.0
        %727 = vmatpush1.msra.mxu0 0.0
        %728 = vmatprep.subr.mxu0 0.0
        %729 = vmatpush1.msra.mxu0 0.0
        %730 = vmatprep.subr.mxu0 0.0
        %731 = vmatpush1.msra.mxu0 0.0
        %732 = vmatprep.subr.mxu0 0.0
        %733 = vmatpush1.msra.mxu0 0.0
        %734 = vmatprep.subr.mxu0 0.0
        %735 = vmatpush1.msra.mxu0 0.0
        %736 = vmatprep.subr.mxu0 0.0
        %737 = vmatpush1.msra.mxu0 0.0
        %738 = vmatprep.subr.mxu0 0.0
        %739 = vmatpush1.msra.mxu0 0.0
        %740 = vmatprep.subr.mxu0 0.0
        %741 = vmatpush1.msra.mxu0 0.0
        %742 = vmatprep.subr.mxu0 0.0
        %743 = vmatpush1.msra.mxu0 0.0
        %744 = vmatprep.subr.mxu0 0.0
        %745 = vmatpush1.msra.mxu0 0.0
        %746 = vmatprep.subr.mxu0 0.0
        %747 = vmatpush1.msra.mxu0 0.0
        %748 = vmatprep.subr.mxu0 0.0
        %749 = vmatpush1.msra.mxu0 0.0
        %750 = vmatprep.subr.mxu0 0.0
        %751 = vmatpush1.msra.mxu0 0.0
        %752 = vmatprep.subr.mxu0 0.0
        %753 = vmatpush1.msra.mxu0 0.0
        %754 = vmatprep.subr.mxu0 0.0
        %755 = vmatpush1.msra.mxu0 0.0
        %756 = vmatprep.subr.mxu0 0.0
        %757 = vmatpush1.msra.mxu0 0.0
        %758 = vmatprep.subr.mxu0 0.0
        %759 = vmatpush1.msra.mxu0 0.0
        %760 = vmatprep.subr.mxu0 0.0
        %761 = vmatpush1.msra.mxu0 0.0
        %762 = vmatprep.subr.mxu0 0.0
        %763 = vmatpush1.msra.mxu0 0.0
        %764 = vmatprep.subr.mxu0 0.0
        %765 = vmatpush1.msra.mxu0 0.0
        %766 = vmatprep.subr.mxu0 0.0
        %767 = vmatpush1.msra.mxu0 0.0
        %768 = vmatprep.subr.mxu0 0.0
        %769 = vmatpush1.msra.mxu0 0.0
        %770 = vmatprep.subr.mxu0 0.0
        %771 = vmatpush1.msra.mxu0 0.0
        %772 = vmatprep.subr.mxu0 0.0
        %773 = vmatpush1.msra.mxu0 0.0
        %774 = vmatprep.subr.mxu0 0.0
        %775 = vmatpush1.msra.mxu0 0.0
        %776 = vmatprep.subr.mxu0 0.0
        %777 = vmatpush1.msra.mxu0 0.0
        %778 = vmatprep.subr.mxu0 0.0
        %779 = vmatpush1.msra.mxu0 0.0
        %780 = vmatprep.subr.mxu0 0.0
        %781 = vmatpush1.msra.mxu0 0.0
        %782 = vmatprep.subr.mxu0 0.0
        %783 = vmatpush1.msra.mxu0 0.0
        %784 = vmatprep.subr.mxu0 0.0
        %785 = vmatpush1.msra.mxu0 0.0
        %786 = vmatprep.mubr.f32.mxu0 0.0
        %v787 = vand.u32 %v718, 4294901760
        %v788 = vsub.f32 %v718, %v787
        %v789 = vand.u32 %v788, 4294901760
        %v790 = vsub.f32 %v788, %v789
        %v791 = vand.u32 %v790, 4294901760
        %792 = vmatmul.mubr.f32.gmra.mrb[0].mxu0 %v791
        %v793 = vpop.f32.mrb[0].mxu0
        %v794 = vadd.f32 0.0, %v793
        %v795 = vpop.f32.mrb[0].mxu0
        %796 = vdwg.mxu0
        %797 = vmatprep.subr.mxu0 0.0
        %v798 = vand.u32 %v716, 4294901760
        %v799 = vsub.f32 %v716, %v798
        %v800 = vand.u32 %v799, 4294901760
        %v801 = vsub.f32 %v799, %v800
        %v802 = vand.u32 %v801, 4294901760
        %803 = vmatpush1.msra.mxu0 %v802
        %804 = vmatprep.subr.mxu0 0.0
        %v805 = vand.u32 %v717, 4294901760
        %v806 = vsub.f32 %v717, %v805
        %v807 = vand.u32 %v806, 4294901760
        %v808 = vsub.f32 %v806, %v807
        %v809 = vand.u32 %v808, 4294901760
        %810 = vmatpush1.msra.mxu0 %v809
        %811 = vmatprep.subr.mxu0 0.0
        %812 = vmatpush1.msra.mxu0 0.0
        %813 = vmatprep.subr.mxu0 0.0
        %814 = vmatpush1.msra.mxu0 0.0
        %815 = vmatprep.subr.mxu0 0.0
        %816 = vmatpush1.msra.mxu0 0.0
        %817 = vmatprep.subr.mxu0 0.0
        %818 = vmatpush1.msra.mxu0 0.0
        %819 = vmatprep.subr.mxu0 0.0
        %820 = vmatpush1.msra.mxu0 0.0
        %821 = vmatprep.subr.mxu0 0.0
        %822 = vmatpush1.msra.mxu0 0.0
        %823 = vmatprep.subr.mxu0 0.0
        %824 = vmatpush1.msra.mxu0 0.0
        %825 = vmatprep.subr.mxu0 0.0
        %826 = vmatpush1.msra.mxu0 0.0
        %827 = vmatprep.subr.mxu0 0.0
        %828 = vmatpush1.msra.mxu0 0.0
        %829 = vmatprep.subr.mxu0 0.0
        %830 = vmatpush1.msra.mxu0 0.0
        %831 = vmatprep.subr.mxu0 0.0
        %832 = vmatpush1.msra.mxu0 0.0
        %833 = vmatprep.subr.mxu0 0.0
        %834 = vmatpush1.msra.mxu0 0.0
        %835 = vmatprep.subr.mxu0 0.0
        %836 = vmatpush1.msra.mxu0 0.0
        %837 = vmatprep.subr.mxu0 0.0
        %838 = vmatpush1.msra.mxu0 0.0
        %839 = vmatprep.subr.mxu0 0.0
        %840 = vmatpush1.msra.mxu0 0.0
        %841 = vmatprep.subr.mxu0 0.0
        %842 = vmatpush1.msra.mxu0 0.0
        %843 = vmatprep.subr.mxu0 0.0
        %844 = vmatpush1.msra.mxu0 0.0
        %845 = vmatprep.subr.mxu0 0.0
        %846 = vmatpush1.msra.mxu0 0.0
        %847 = vmatprep.subr.mxu0 0.0
        %848 = vmatpush1.msra.mxu0 0.0
        %849 = vmatprep.subr.mxu0 0.0
        %850 = vmatpush1.msra.mxu0 0.0
        %851 = vmatprep.subr.mxu0 0.0
        %852 = vmatpush1.msra.mxu0 0.0
        %853 = vmatprep.subr.mxu0 0.0
        %854 = vmatpush1.msra.mxu0 0.0
        %855 = vmatprep.subr.mxu0 0.0
        %856 = vmatpush1.msra.mxu0 0.0
        %857 = vmatprep.subr.mxu0 0.0
        %858 = vmatpush1.msra.mxu0 0.0
        %859 = vmatprep.subr.mxu0 0.0
        %860 = vmatpush1.msra.mxu0 0.0
        %861 = vmatprep.subr.mxu0 0.0
        %862 = vmatpush1.msra.mxu0 0.0
        %863 = vmatprep.subr.mxu0 0.0
        %864 = vmatpush1.msra.mxu0 0.0
        %865 = vmatprep.subr.mxu0 0.0
        %866 = vmatpush1.msra.mxu0 0.0
        %867 = vmatprep.subr.mxu0 0.0
        %868 = vmatpush1.msra.mxu0 0.0
        %869 = vmatprep.subr.mxu0 0.0
        %870 = vmatpush1.msra.mxu0 0.0
        %871 = vmatprep.mubr.f32.mxu0 0.0
        %v872 = vand.u32 %v718, 4294901760
        %873 = vmatmul.mubr.f32.gmra.mrb[0].mxu0 %v872
        %v874 = vpop.f32.mrb[0].mxu0
        %v875 = vadd.f32 %v794, %v874
        %v876 = vpop.f32.mrb[0].mxu0
        %877 = vdwg.mxu0
        %878 = vmatprep.subr.mxu0 0.0
        %v879 = vand.u32 %v716, 4294901760
        %v880 = vsub.f32 %v716, %v879
        %881 = vmatpush1.msra.mxu0 %v880
        %882 = vmatprep.subr.mxu0 0.0
        %v883 = vand.u32 %v717, 4294901760
        %v884 = vsub.f32 %v717, %v883
        %885 = vmatpush1.msra.mxu0 %v884
        %886 = vmatprep.subr.mxu0 0.0
        %887 = vmatpush1.msra.mxu0 0.0
        %888 = vmatprep.subr.mxu0 0.0
        %889 = vmatpush1.msra.mxu0 0.0
        %890 = vmatprep.subr.mxu0 0.0
        %891 = vmatpush1.msra.mxu0 0.0
        %892 = vmatprep.subr.mxu0 0.0
        %893 = vmatpush1.msra.mxu0 0.0
        %894 = vmatprep.subr.mxu0 0.0
        %895 = vmatpush1.msra.mxu0 0.0
        %896 = vmatprep.subr.mxu0 0.0
        %897 = vmatpush1.msra.mxu0 0.0
        %898 = vmatprep.subr.mxu0 0.0
        %899 = vmatpush1.msra.mxu0 0.0
        %900 = vmatprep.subr.mxu0 0.0
        %901 = vmatpush1.msra.mxu0 0.0
        %902 = vmatprep.subr.mxu0 0.0
        %903 = vmatpush1.msra.mxu0 0.0
        %904 = vmatprep.subr.mxu0 0.0
        %905 = vmatpush1.msra.mxu0 0.0
        %906 = vmatprep.subr.mxu0 0.0
        %907 = vmatpush1.msra.mxu0 0.0
        %908 = vmatprep.subr.mxu0 0.0
        %909 = vmatpush1.msra.mxu0 0.0
        %910 = vmatprep.subr.mxu0 0.0
        %911 = vmatpush1.msra.mxu0 0.0
        %912 = vmatprep.subr.mxu0 0.0
        %913 = vmatpush1.msra.mxu0 0.0
        %914 = vmatprep.subr.mxu0 0.0
        %915 = vmatpush1.msra.mxu0 0.0
        %916 = vmatprep.subr.mxu0 0.0
        %917 = vmatpush1.msra.mxu0 0.0
        %918 = vmatprep.subr.mxu0 0.0
        %919 = vmatpush1.msra.mxu0 0.0
        %920 = vmatprep.subr.mxu0 0.0
        %921 = vmatpush1.msra.mxu0 0.0
        %922 = vmatprep.subr.mxu0 0.0
        %923 = vmatpush1.msra.mxu0 0.0
        %924 = vmatprep.subr.mxu0 0.0
        %925 = vmatpush1.msra.mxu0 0.0
        %926 = vmatprep.subr.mxu0 0.0
        %927 = vmatpush1.msra.mxu0 0.0
        %928 = vmatprep.subr.mxu0 0.0
        %929 = vmatpush1.msra.mxu0 0.0
        %930 = vmatprep.subr.mxu0 0.0
        %931 = vmatpush1.msra.mxu0 0.0
        %932 = vmatprep.subr.mxu0 0.0
        %933 = vmatpush1.msra.mxu0 0.0
        %934 = vmatprep.subr.mxu0 0.0
        %935 = vmatpush1.msra.mxu0 0.0
        %936 = vmatprep.subr.mxu0 0.0
        %937 = vmatpush1.msra.mxu0 0.0
        %938 = vmatprep.subr.mxu0 0.0
        %939 = vmatpush1.msra.mxu0 0.0
        %940 = vmatprep.subr.mxu0 0.0
        %941 = vmatpush1.msra.mxu0 0.0
        %942 = vmatprep.subr.mxu0 0.0
        %943 = vmatpush1.msra.mxu0 0.0
        %944 = vmatprep.subr.mxu0 0.0
        %945 = vmatpush1.msra.mxu0 0.0
        %946 = vmatprep.mubr.f32.mxu0 0.0
        %v947 = vand.u32 %v718, 4294901760
        %v948 = vsub.f32 %v718, %v947
        %949 = vmatmul.mubr.f32.gmra.mrb[0].mxu0 %v948
        %v950 = vpop.f32.mrb[0].mxu0
        %v951 = vadd.f32 %v875, %v950
        %v952 = vpop.f32.mrb[0].mxu0
        %953 = vdwg.mxu0
        %954 = vmatprep.subr.mxu0 0.0
        %v955 = vand.u32 %v716, 4294901760
        %956 = vmatpush1.msra.mxu0 %v955
        %957 = vmatprep.subr.mxu0 0.0
        %v958 = vand.u32 %v717, 4294901760
        %959 = vmatpush1.msra.mxu0 %v958
        %960 = vmatprep.subr.mxu0 0.0
        %961 = vmatpush1.msra.mxu0 0.0
        %962 = vmatprep.subr.mxu0 0.0
        %963 = vmatpush1.msra.mxu0 0.0
        %964 = vmatprep.subr.mxu0 0.0
        %965 = vmatpush1.msra.mxu0 0.0
        %966 = vmatprep.subr.mxu0 0.0
        %967 = vmatpush1.msra.mxu0 0.0
        %968 = vmatprep.subr.mxu0 0.0
        %969 = vmatpush1.msra.mxu0 0.0
        %970 = vmatprep.subr.mxu0 0.0
        %971 = vmatpush1.msra.mxu0 0.0
        %972 = vmatprep.subr.mxu0 0.0
        %973 = vmatpush1.msra.mxu0 0.0
        %974 = vmatprep.subr.mxu0 0.0
        %975 = vmatpush1.msra.mxu0 0.0
        %976 = vmatprep.subr.mxu0 0.0
        %977 = vmatpush1.msra.mxu0 0.0
        %978 = vmatprep.subr.mxu0 0.0
        %979 = vmatpush1.msra.mxu0 0.0
        %980 = vmatprep.subr.mxu0 0.0
        %981 = vmatpush1.msra.mxu0 0.0
        %982 = vmatprep.subr.mxu0 0.0
        %983 = vmatpush1.msra.mxu0 0.0
        %984 = vmatprep.subr.mxu0 0.0
        %985 = vmatpush1.msra.mxu0 0.0
        %986 = vmatprep.subr.mxu0 0.0
        %987 = vmatpush1.msra.mxu0 0.0
        %988 = vmatprep.subr.mxu0 0.0
        %989 = vmatpush1.msra.mxu0 0.0
        %990 = vmatprep.subr.mxu0 0.0
        %991 = vmatpush1.msra.mxu0 0.0
        %992 = vmatprep.subr.mxu0 0.0
        %993 = vmatpush1.msra.mxu0 0.0
        %994 = vmatprep.subr.mxu0 0.0
        %995 = vmatpush1.msra.mxu0 0.0
        %996 = vmatprep.subr.mxu0 0.0
        %997 = vmatpush1.msra.mxu0 0.0
        %998 = vmatprep.subr.mxu0 0.0
        %999 = vmatpush1.msra.mxu0 0.0
        %1000 = vmatprep.subr.mxu0 0.0
        %1001 = vmatpush1.msra.mxu0 0.0
        %1002 = vmatprep.subr.mxu0 0.0
        %1003 = vmatpush1.msra.mxu0 0.0
        %1004 = vmatprep.subr.mxu0 0.0
        %1005 = vmatpush1.msra.mxu0 0.0
        %1006 = vmatprep.subr.mxu0 0.0
        %1007 = vmatpush1.msra.mxu0 0.0
        %1008 = vmatprep.subr.mxu0 0.0
        %1009 = vmatpush1.msra.mxu0 0.0
        %1010 = vmatprep.subr.mxu0 0.0
        %1011 = vmatpush1.msra.mxu0 0.0
        %1012 = vmatprep.subr.mxu0 0.0
        %1013 = vmatpush1.msra.mxu0 0.0
        %1014 = vmatprep.subr.mxu0 0.0
        %1015 = vmatpush1.msra.mxu0 0.0
        %1016 = vmatprep.subr.mxu0 0.0
        %1017 = vmatpush1.msra.mxu0 0.0
        %1018 = vmatprep.subr.mxu0 0.0
        %1019 = vmatpush1.msra.mxu0 0.0
        %1020 = vmatprep.mubr.f32.mxu0 0.0
        %v1021 = vand.u32 %v718, 4294901760
        %v1022 = vsub.f32 %v718, %v1021
        %v1023 = vand.u32 %v1022, 4294901760
        %1024 = vmatmul.mubr.f32.gmra.mrb[0].mxu0 %v1023
        %v1025 = vpop.f32.mrb[0].mxu0
        %v1026 = vadd.f32 %v951, %v1025
        %v1027 = vpop.f32.mrb[0].mxu0
        %1028 = vdwg.mxu0
        %1029 = vmatprep.subr.mxu0 0.0
        %v1030 = vand.u32 %v716, 4294901760
        %v1031 = vsub.f32 %v716, %v1030
        %v1032 = vand.u32 %v1031, 4294901760
        %1033 = vmatpush1.msra.mxu0 %v1032
        %1034 = vmatprep.subr.mxu0 0.0
        %v1035 = vand.u32 %v717, 4294901760
        %v1036 = vsub.f32 %v717, %v1035
        %v1037 = vand.u32 %v1036, 4294901760
        %1038 = vmatpush1.msra.mxu0 %v1037
        %1039 = vmatprep.subr.mxu0 0.0
        %1040 = vmatpush1.msra.mxu0 0.0
        %1041 = vmatprep.subr.mxu0 0.0
        %1042 = vmatpush1.msra.mxu0 0.0
        %1043 = vmatprep.subr.mxu0 0.0
        %1044 = vmatpush1.msra.mxu0 0.0
        %1045 = vmatprep.subr.mxu0 0.0
        %1046 = vmatpush1.msra.mxu0 0.0
        %1047 = vmatprep.subr.mxu0 0.0
        %1048 = vmatpush1.msra.mxu0 0.0
        %1049 = vmatprep.subr.mxu0 0.0
        %1050 = vmatpush1.msra.mxu0 0.0
        %1051 = vmatprep.subr.mxu0 0.0
        %1052 = vmatpush1.msra.mxu0 0.0
        %1053 = vmatprep.subr.mxu0 0.0
        %1054 = vmatpush1.msra.mxu0 0.0
        %1055 = vmatprep.subr.mxu0 0.0
        %1056 = vmatpush1.msra.mxu0 0.0
        %1057 = vmatprep.subr.mxu0 0.0
        %1058 = vmatpush1.msra.mxu0 0.0
        %1059 = vmatprep.subr.mxu0 0.0
        %1060 = vmatpush1.msra.mxu0 0.0
        %1061 = vmatprep.subr.mxu0 0.0
        %1062 = vmatpush1.msra.mxu0 0.0
        %1063 = vmatprep.subr.mxu0 0.0
        %1064 = vmatpush1.msra.mxu0 0.0
        %1065 = vmatprep.subr.mxu0 0.0
        %1066 = vmatpush1.msra.mxu0 0.0
        %1067 = vmatprep.subr.mxu0 0.0
        %1068 = vmatpush1.msra.mxu0 0.0
        %1069 = vmatprep.subr.mxu0 0.0
        %1070 = vmatpush1.msra.mxu0 0.0
        %1071 = vmatprep.subr.mxu0 0.0
        %1072 = vmatpush1.msra.mxu0 0.0
        %1073 = vmatprep.subr.mxu0 0.0
        %1074 = vmatpush1.msra.mxu0 0.0
        %1075 = vmatprep.subr.mxu0 0.0
        %1076 = vmatpush1.msra.mxu0 0.0
        %1077 = vmatprep.subr.mxu0 0.0
        %1078 = vmatpush1.msra.mxu0 0.0
        %1079 = vmatprep.subr.mxu0 0.0
        %1080 = vmatpush1.msra.mxu0 0.0
        %1081 = vmatprep.subr.mxu0 0.0
        %1082 = vmatpush1.msra.mxu0 0.0
        %1083 = vmatprep.subr.mxu0 0.0
        %1084 = vmatpush1.msra.mxu0 0.0
        %1085 = vmatprep.subr.mxu0 0.0
        %1086 = vmatpush1.msra.mxu0 0.0
        %1087 = vmatprep.subr.mxu0 0.0
        %1088 = vmatpush1.msra.mxu0 0.0
        %1089 = vmatprep.subr.mxu0 0.0
        %1090 = vmatpush1.msra.mxu0 0.0
        %1091 = vmatprep.subr.mxu0 0.0
        %1092 = vmatpush1.msra.mxu0 0.0
        %1093 = vmatprep.subr.mxu0 0.0
        %1094 = vmatpush1.msra.mxu0 0.0
        %1095 = vmatprep.subr.mxu0 0.0
        %1096 = vmatpush1.msra.mxu0 0.0
        %1097 = vmatprep.subr.mxu0 0.0
        %1098 = vmatpush1.msra.mxu0 0.0
        %1099 = vmatprep.mubr.f32.mxu0 0.0
        %v1100 = vand.u32 %v718, 4294901760
        %1101 = vmatmul.mubr.f32.gmra.mrb[0].mxu0 %v1100
        %v1102 = vpop.f32.mrb[0].mxu0
        %v1103 = vadd.f32 %v1026, %v1102
        %v1104 = vpop.f32.mrb[0].mxu0
        %1105 = vdwg.mxu0
        %1106 = vmatprep.subr.mxu0 0.0
        %v1107 = vand.u32 %v716, 4294901760
        %1108 = vmatpush1.msra.mxu0 %v1107
        %1109 = vmatprep.subr.mxu0 0.0
        %v1110 = vand.u32 %v717, 4294901760
        %1111 = vmatpush1.msra.mxu0 %v1110
        %1112 = vmatprep.subr.mxu0 0.0
        %1113 = vmatpush1.msra.mxu0 0.0
        %1114 = vmatprep.subr.mxu0 0.0
        %1115 = vmatpush1.msra.mxu0 0.0
        %1116 = vmatprep.subr.mxu0 0.0
        %1117 = vmatpush1.msra.mxu0 0.0
        %1118 = vmatprep.subr.mxu0 0.0
        %1119 = vmatpush1.msra.mxu0 0.0
        %1120 = vmatprep.subr.mxu0 0.0
        %1121 = vmatpush1.msra.mxu0 0.0
        %1122 = vmatprep.subr.mxu0 0.0
        %1123 = vmatpush1.msra.mxu0 0.0
        %1124 = vmatprep.subr.mxu0 0.0
        %1125 = vmatpush1.msra.mxu0 0.0
        %1126 = vmatprep.subr.mxu0 0.0
        %1127 = vmatpush1.msra.mxu0 0.0
        %1128 = vmatprep.subr.mxu0 0.0
        %1129 = vmatpush1.msra.mxu0 0.0
        %1130 = vmatprep.subr.mxu0 0.0
        %1131 = vmatpush1.msra.mxu0 0.0
        %1132 = vmatprep.subr.mxu0 0.0
        %1133 = vmatpush1.msra.mxu0 0.0
        %1134 = vmatprep.subr.mxu0 0.0
        %1135 = vmatpush1.msra.mxu0 0.0
        %1136 = vmatprep.subr.mxu0 0.0
        %1137 = vmatpush1.msra.mxu0 0.0
        %1138 = vmatprep.subr.mxu0 0.0
        %1139 = vmatpush1.msra.mxu0 0.0
        %1140 = vmatprep.subr.mxu0 0.0
        %1141 = vmatpush1.msra.mxu0 0.0
        %1142 = vmatprep.subr.mxu0 0.0
        %1143 = vmatpush1.msra.mxu0 0.0
        %1144 = vmatprep.subr.mxu0 0.0
        %1145 = vmatpush1.msra.mxu0 0.0
        %1146 = vmatprep.subr.mxu0 0.0
        %1147 = vmatpush1.msra.mxu0 0.0
        %1148 = vmatprep.subr.mxu0 0.0
        %1149 = vmatpush1.msra.mxu0 0.0
        %1150 = vmatprep.subr.mxu0 0.0
        %1151 = vmatpush1.msra.mxu0 0.0
        %1152 = vmatprep.subr.mxu0 0.0
        %1153 = vmatpush1.msra.mxu0 0.0
        %1154 = vmatprep.subr.mxu0 0.0
        %1155 = vmatpush1.msra.mxu0 0.0
        %1156 = vmatprep.subr.mxu0 0.0
        %1157 = vmatpush1.msra.mxu0 0.0
        %1158 = vmatprep.subr.mxu0 0.0
        %1159 = vmatpush1.msra.mxu0 0.0
        %1160 = vmatprep.subr.mxu0 0.0
        %1161 = vmatpush1.msra.mxu0 0.0
        %1162 = vmatprep.subr.mxu0 0.0
        %1163 = vmatpush1.msra.mxu0 0.0
        %1164 = vmatprep.subr.mxu0 0.0
        %1165 = vmatpush1.msra.mxu0 0.0
        %1166 = vmatprep.subr.mxu0 0.0
        %1167 = vmatpush1.msra.mxu0 0.0
        %1168 = vmatprep.subr.mxu0 0.0
        %1169 = vmatpush1.msra.mxu0 0.0
        %1170 = vmatprep.subr.mxu0 0.0
        %1171 = vmatpush1.msra.mxu0 0.0
        %1172 = vmatprep.mubr.f32.mxu0 0.0
        %v1173 = vand.u32 %v718, 4294901760
        %1174 = vmatmul.mubr.f32.gmra.mrb[0].mxu0 %v1173
        %v1175 = vpop.f32.mrb[0].mxu0
        %v1176 = vadd.f32 %v1103, %v1175
        %v1177 = vpop.f32.mrb[0].mxu0
        %1178 = vdwg.mxu0
        %1179 = vmatprep.subr.mxu0 0.0
        %v1180 = vand.u32 %v699, 4294901760
        %1181 = vmatpush1.msra.mxu0 %v1180
        %1182 = vmatprep.subr.mxu0 0.0
        %v1183 = vand.u32 %v700, 4294901760
        %1184 = vmatpush1.msra.mxu0 %v1183
        %1185 = vmatprep.subr.mxu0 0.0
        %1186 = vmatpush1.msra.mxu0 0.0
        %1187 = vmatprep.subr.mxu0 0.0
        %1188 = vmatpush1.msra.mxu0 0.0
        %1189 = vmatprep.subr.mxu0 0.0
        %1190 = vmatpush1.msra.mxu0 0.0
        %1191 = vmatprep.subr.mxu0 0.0
        %1192 = vmatpush1.msra.mxu0 0.0
        %1193 = vmatprep.subr.mxu0 0.0
        %1194 = vmatpush1.msra.mxu0 0.0
        %1195 = vmatprep.subr.mxu0 0.0
        %1196 = vmatpush1.msra.mxu0 0.0
        %1197 = vmatprep.subr.mxu0 0.0
        %1198 = vmatpush1.msra.mxu0 0.0
        %1199 = vmatprep.subr.mxu0 0.0
        %1200 = vmatpush1.msra.mxu0 0.0
        %1201 = vmatprep.subr.mxu0 0.0
        %1202 = vmatpush1.msra.mxu0 0.0
        %1203 = vmatprep.subr.mxu0 0.0
        %1204 = vmatpush1.msra.mxu0 0.0
        %1205 = vmatprep.subr.mxu0 0.0
        %1206 = vmatpush1.msra.mxu0 0.0
        %1207 = vmatprep.subr.mxu0 0.0
        %1208 = vmatpush1.msra.mxu0 0.0
        %1209 = vmatprep.subr.mxu0 0.0
        %1210 = vmatpush1.msra.mxu0 0.0
        %1211 = vmatprep.subr.mxu0 0.0
        %1212 = vmatpush1.msra.mxu0 0.0
        %1213 = vmatprep.subr.mxu0 0.0
        %1214 = vmatpush1.msra.mxu0 0.0
        %1215 = vmatprep.subr.mxu0 0.0
        %1216 = vmatpush1.msra.mxu0 0.0
        %1217 = vmatprep.subr.mxu0 0.0
        %1218 = vmatpush1.msra.mxu0 0.0
        %1219 = vmatprep.subr.mxu0 0.0
        %1220 = vmatpush1.msra.mxu0 0.0
        %1221 = vmatprep.subr.mxu0 0.0
        %1222 = vmatpush1.msra.mxu0 0.0
        %1223 = vmatprep.subr.mxu0 0.0
        %1224 = vmatpush1.msra.mxu0 0.0
        %1225 = vmatprep.subr.mxu0 0.0
        %1226 = vmatpush1.msra.mxu0 0.0
        %1227 = vmatprep.subr.mxu0 0.0
        %1228 = vmatpush1.msra.mxu0 0.0
        %1229 = vmatprep.subr.mxu0 0.0
        %1230 = vmatpush1.msra.mxu0 0.0
        %1231 = vmatprep.subr.mxu0 0.0
        %1232 = vmatpush1.msra.mxu0 0.0
        %1233 = vmatprep.subr.mxu0 0.0
        %1234 = vmatpush1.msra.mxu0 0.0
        %1235 = vmatprep.subr.mxu0 0.0
        %1236 = vmatpush1.msra.mxu0 0.0
        %1237 = vmatprep.subr.mxu0 0.0
        %1238 = vmatpush1.msra.mxu0 0.0
        %1239 = vmatprep.subr.mxu0 0.0
        %1240 = vmatpush1.msra.mxu0 0.0
        %1241 = vmatprep.subr.mxu0 0.0
        %1242 = vmatpush1.msra.mxu0 0.0
        %1243 = vmatprep.subr.mxu0 0.0
        %1244 = vmatpush1.msra.mxu0 0.0
        %1245 = vmatprep.mubr.f32.mxu0 0.0
        %v1246 = vand.u32 %v718, 4294901760
        %v1247 = vsub.f32 %v718, %v1246
        %v1248 = vand.u32 %v1247, 4294901760
        %v1249 = vsub.f32 %v1247, %v1248
        %v1250 = vand.u32 %v1249, 4294901760
        %1251 = vmatmul.mubr.f32.gmra.mrb[0].mxu0 %v1250
        %v1252 = vpop.f32.mrb[0].mxu0
        %v1253 = vadd.f32 %v1176, %v1252
        %v1254 = vpop.f32.mrb[0].mxu0
        %1255 = vdwg.mxu0
        %1256 = vmatprep.subr.mxu0 0.0
        %v1257 = vand.u32 %v699, 4294901760
        %v1258 = vsub.f32 %v699, %v1257
        %v1259 = vand.u32 %v1258, 4294901760
        %v1260 = vsub.f32 %v1258, %v1259
        %v1261 = vand.u32 %v1260, 4294901760
        %1262 = vmatpush1.msra.mxu0 %v1261
        %1263 = vmatprep.subr.mxu0 0.0
        %v1264 = vand.u32 %v700, 4294901760
        %v1265 = vsub.f32 %v700, %v1264
        %v1266 = vand.u32 %v1265, 4294901760
        %v1267 = vsub.f32 %v1265, %v1266
        %v1268 = vand.u32 %v1267, 4294901760
        %1269 = vmatpush1.msra.mxu0 %v1268
        %1270 = vmatprep.subr.mxu0 0.0
        %1271 = vmatpush1.msra.mxu0 0.0
        %1272 = vmatprep.subr.mxu0 0.0
        %1273 = vmatpush1.msra.mxu0 0.0
        %1274 = vmatprep.subr.mxu0 0.0
        %1275 = vmatpush1.msra.mxu0 0.0
        %1276 = vmatprep.subr.mxu0 0.0
        %1277 = vmatpush1.msra.mxu0 0.0
        %1278 = vmatprep.subr.mxu0 0.0
        %1279 = vmatpush1.msra.mxu0 0.0
        %1280 = vmatprep.subr.mxu0 0.0
        %1281 = vmatpush1.msra.mxu0 0.0
        %1282 = vmatprep.subr.mxu0 0.0
        %1283 = vmatpush1.msra.mxu0 0.0
        %1284 = vmatprep.subr.mxu0 0.0
        %1285 = vmatpush1.msra.mxu0 0.0
        %1286 = vmatprep.subr.mxu0 0.0
        %1287 = vmatpush1.msra.mxu0 0.0
        %1288 = vmatprep.subr.mxu0 0.0
        %1289 = vmatpush1.msra.mxu0 0.0
        %1290 = vmatprep.subr.mxu0 0.0
        %1291 = vmatpush1.msra.mxu0 0.0
        %1292 = vmatprep.subr.mxu0 0.0
        %1293 = vmatpush1.msra.mxu0 0.0
        %1294 = vmatprep.subr.mxu0 0.0
        %1295 = vmatpush1.msra.mxu0 0.0
        %1296 = vmatprep.subr.mxu0 0.0
        %1297 = vmatpush1.msra.mxu0 0.0
        %1298 = vmatprep.subr.mxu0 0.0
        %1299 = vmatpush1.msra.mxu0 0.0
        %1300 = vmatprep.subr.mxu0 0.0
        %1301 = vmatpush1.msra.mxu0 0.0
        %1302 = vmatprep.subr.mxu0 0.0
        %1303 = vmatpush1.msra.mxu0 0.0
        %1304 = vmatprep.subr.mxu0 0.0
        %1305 = vmatpush1.msra.mxu0 0.0
        %1306 = vmatprep.subr.mxu0 0.0
        %1307 = vmatpush1.msra.mxu0 0.0
        %1308 = vmatprep.subr.mxu0 0.0
        %1309 = vmatpush1.msra.mxu0 0.0
        %1310 = vmatprep.subr.mxu0 0.0
        %1311 = vmatpush1.msra.mxu0 0.0
        %1312 = vmatprep.subr.mxu0 0.0
        %1313 = vmatpush1.msra.mxu0 0.0
        %1314 = vmatprep.subr.mxu0 0.0
        %1315 = vmatpush1.msra.mxu0 0.0
        %1316 = vmatprep.subr.mxu0 0.0
        %1317 = vmatpush1.msra.mxu0 0.0
        %1318 = vmatprep.subr.mxu0 0.0
        %1319 = vmatpush1.msra.mxu0 0.0
        %1320 = vmatprep.subr.mxu0 0.0
        %1321 = vmatpush1.msra.mxu0 0.0
        %1322 = vmatprep.subr.mxu0 0.0
        %1323 = vmatpush1.msra.mxu0 0.0
        %1324 = vmatprep.subr.mxu0 0.0
        %1325 = vmatpush1.msra.mxu0 0.0
        %1326 = vmatprep.subr.mxu0 0.0
        %1327 = vmatpush1.msra.mxu0 0.0
        %1328 = vmatprep.subr.mxu0 0.0
        %1329 = vmatpush1.msra.mxu0 0.0
        %1330 = vmatprep.mubr.f32.mxu0 0.0
        %v1331 = vand.u32 %v718, 4294901760
        %1332 = vmatmul.mubr.f32.gmra.mrb[0].mxu0 %v1331
        %v1333 = vpop.f32.mrb[0].mxu0
        %v1334 = vadd.f32 %v1253, %v1333
        %v1335 = vpop.f32.mrb[0].mxu0
        %1336 = vdwg.mxu0
        %1337 = vmatprep.subr.mxu0 0.0
        %v1338 = vand.u32 %v699, 4294901760
        %v1339 = vsub.f32 %v699, %v1338
        %1340 = vmatpush1.msra.mxu0 %v1339
        %1341 = vmatprep.subr.mxu0 0.0
        %v1342 = vand.u32 %v700, 4294901760
        %v1343 = vsub.f32 %v700, %v1342
        %1344 = vmatpush1.msra.mxu0 %v1343
        %1345 = vmatprep.subr.mxu0 0.0
        %1346 = vmatpush1.msra.mxu0 0.0
        %1347 = vmatprep.subr.mxu0 0.0
        %1348 = vmatpush1.msra.mxu0 0.0
        %1349 = vmatprep.subr.mxu0 0.0
        %1350 = vmatpush1.msra.mxu0 0.0
        %1351 = vmatprep.subr.mxu0 0.0
        %1352 = vmatpush1.msra.mxu0 0.0
        %1353 = vmatprep.subr.mxu0 0.0
        %1354 = vmatpush1.msra.mxu0 0.0
        %1355 = vmatprep.subr.mxu0 0.0
        %1356 = vmatpush1.msra.mxu0 0.0
        %1357 = vmatprep.subr.mxu0 0.0
        %1358 = vmatpush1.msra.mxu0 0.0
        %1359 = vmatprep.subr.mxu0 0.0
        %1360 = vmatpush1.msra.mxu0 0.0
        %1361 = vmatprep.subr.mxu0 0.0
        %1362 = vmatpush1.msra.mxu0 0.0
        %1363 = vmatprep.subr.mxu0 0.0
        %1364 = vmatpush1.msra.mxu0 0.0
        %1365 = vmatprep.subr.mxu0 0.0
        %1366 = vmatpush1.msra.mxu0 0.0
        %1367 = vmatprep.subr.mxu0 0.0
        %1368 = vmatpush1.msra.mxu0 0.0
        %1369 = vmatprep.subr.mxu0 0.0
        %1370 = vmatpush1.msra.mxu0 0.0
        %1371 = vmatprep.subr.mxu0 0.0
        %1372 = vmatpush1.msra.mxu0 0.0
        %1373 = vmatprep.subr.mxu0 0.0
        %1374 = vmatpush1.msra.mxu0 0.0
        %1375 = vmatprep.subr.mxu0 0.0
        %1376 = vmatpush1.msra.mxu0 0.0
        %1377 = vmatprep.subr.mxu0 0.0
        %1378 = vmatpush1.msra.mxu0 0.0
        %1379 = vmatprep.subr.mxu0 0.0
        %1380 = vmatpush1.msra.mxu0 0.0
        %1381 = vmatprep.subr.mxu0 0.0
        %1382 = vmatpush1.msra.mxu0 0.0
        %1383 = vmatprep.subr.mxu0 0.0
        %1384 = vmatpush1.msra.mxu0 0.0
        %1385 = vmatprep.subr.mxu0 0.0
        %1386 = vmatpush1.msra.mxu0 0.0
        %1387 = vmatprep.subr.mxu0 0.0
        %1388 = vmatpush1.msra.mxu0 0.0
        %1389 = vmatprep.subr.mxu0 0.0
        %1390 = vmatpush1.msra.mxu0 0.0
        %1391 = vmatprep.subr.mxu0 0.0
        %1392 = vmatpush1.msra.mxu0 0.0
        %1393 = vmatprep.subr.mxu0 0.0
        %1394 = vmatpush1.msra.mxu0 0.0
        %1395 = vmatprep.subr.mxu0 0.0
        %1396 = vmatpush1.msra.mxu0 0.0
        %1397 = vmatprep.subr.mxu0 0.0
        %1398 = vmatpush1.msra.mxu0 0.0
        %1399 = vmatprep.subr.mxu0 0.0
        %1400 = vmatpush1.msra.mxu0 0.0
        %1401 = vmatprep.subr.mxu0 0.0
        %1402 = vmatpush1.msra.mxu0 0.0
        %1403 = vmatprep.subr.mxu0 0.0
        %1404 = vmatpush1.msra.mxu0 0.0
        %1405 = vmatprep.mubr.f32.mxu0 0.0
        %v1406 = vand.u32 %v718, 4294901760
        %v1407 = vsub.f32 %v718, %v1406
        %1408 = vmatmul.mubr.f32.gmra.mrb[0].mxu0 %v1407
        %v1409 = vpop.f32.mrb[0].mxu0
        %v1410 = vadd.f32 %v1334, %v1409
        %v1411 = vpop.f32.mrb[0].mxu0
        %1412 = vdwg.mxu0
        %1413 = vmatprep.subr.mxu0 0.0
        %v1414 = vand.u32 %v699, 4294901760
        %1415 = vmatpush1.msra.mxu0 %v1414
        %1416 = vmatprep.subr.mxu0 0.0
        %v1417 = vand.u32 %v700, 4294901760
        %1418 = vmatpush1.msra.mxu0 %v1417
        %1419 = vmatprep.subr.mxu0 0.0
        %1420 = vmatpush1.msra.mxu0 0.0
        %1421 = vmatprep.subr.mxu0 0.0
        %1422 = vmatpush1.msra.mxu0 0.0
        %1423 = vmatprep.subr.mxu0 0.0
        %1424 = vmatpush1.msra.mxu0 0.0
        %1425 = vmatprep.subr.mxu0 0.0
        %1426 = vmatpush1.msra.mxu0 0.0
        %1427 = vmatprep.subr.mxu0 0.0
        %1428 = vmatpush1.msra.mxu0 0.0
        %1429 = vmatprep.subr.mxu0 0.0
        %1430 = vmatpush1.msra.mxu0 0.0
        %1431 = vmatprep.subr.mxu0 0.0
        %1432 = vmatpush1.msra.mxu0 0.0
        %1433 = vmatprep.subr.mxu0 0.0
        %1434 = vmatpush1.msra.mxu0 0.0
        %1435 = vmatprep.subr.mxu0 0.0
        %1436 = vmatpush1.msra.mxu0 0.0
        %1437 = vmatprep.subr.mxu0 0.0
        %1438 = vmatpush1.msra.mxu0 0.0
        %1439 = vmatprep.subr.mxu0 0.0
        %1440 = vmatpush1.msra.mxu0 0.0
        %1441 = vmatprep.subr.mxu0 0.0
        %1442 = vmatpush1.msra.mxu0 0.0
        %1443 = vmatprep.subr.mxu0 0.0
        %1444 = vmatpush1.msra.mxu0 0.0
        %1445 = vmatprep.subr.mxu0 0.0
        %1446 = vmatpush1.msra.mxu0 0.0
        %1447 = vmatprep.subr.mxu0 0.0
        %1448 = vmatpush1.msra.mxu0 0.0
        %1449 = vmatprep.subr.mxu0 0.0
        %1450 = vmatpush1.msra.mxu0 0.0
        %1451 = vmatprep.subr.mxu0 0.0
        %1452 = vmatpush1.msra.mxu0 0.0
        %1453 = vmatprep.subr.mxu0 0.0
        %1454 = vmatpush1.msra.mxu0 0.0
        %1455 = vmatprep.subr.mxu0 0.0
        %1456 = vmatpush1.msra.mxu0 0.0
        %1457 = vmatprep.subr.mxu0 0.0
        %1458 = vmatpush1.msra.mxu0 0.0
        %1459 = vmatprep.subr.mxu0 0.0
        %1460 = vmatpush1.msra.mxu0 0.0
        %1461 = vmatprep.subr.mxu0 0.0
        %1462 = vmatpush1.msra.mxu0 0.0
        %1463 = vmatprep.subr.mxu0 0.0
        %1464 = vmatpush1.msra.mxu0 0.0
        %1465 = vmatprep.subr.mxu0 0.0
        %1466 = vmatpush1.msra.mxu0 0.0
        %1467 = vmatprep.subr.mxu0 0.0
        %1468 = vmatpush1.msra.mxu0 0.0
        %1469 = vmatprep.subr.mxu0 0.0
        %1470 = vmatpush1.msra.mxu0 0.0
        %1471 = vmatprep.subr.mxu0 0.0
        %1472 = vmatpush1.msra.mxu0 0.0
        %1473 = vmatprep.subr.mxu0 0.0
        %1474 = vmatpush1.msra.mxu0 0.0
        %1475 = vmatprep.subr.mxu0 0.0
        %1476 = vmatpush1.msra.mxu0 0.0
        %1477 = vmatprep.subr.mxu0 0.0
        %1478 = vmatpush1.msra.mxu0 0.0
        %1479 = vmatprep.mubr.f32.mxu0 0.0
        %v1480 = vand.u32 %v718, 4294901760
        %v1481 = vsub.f32 %v718, %v1480
        %v1482 = vand.u32 %v1481, 4294901760
        %1483 = vmatmul.mubr.f32.gmra.mrb[0].mxu0 %v1482
        %v1484 = vpop.f32.mrb[0].mxu0
        %v1485 = vadd.f32 %v1410, %v1484
        %v1486 = vpop.f32.mrb[0].mxu0
        %1487 = vdwg.mxu0
        %1488 = vmatprep.subr.mxu0 0.0
        %v1489 = vand.u32 %v699, 4294901760
        %v1490 = vsub.f32 %v699, %v1489
        %v1491 = vand.u32 %v1490, 4294901760
        %1492 = vmatpush1.msra.mxu0 %v1491
        %1493 = vmatprep.subr.mxu0 0.0
        %v1494 = vand.u32 %v700, 4294901760
        %v1495 = vsub.f32 %v700, %v1494
        %v1496 = vand.u32 %v1495, 4294901760
        %1497 = vmatpush1.msra.mxu0 %v1496
        %1498 = vmatprep.subr.mxu0 0.0
        %1499 = vmatpush1.msra.mxu0 0.0
        %1500 = vmatprep.subr.mxu0 0.0
        %1501 = vmatpush1.msra.mxu0 0.0
        %1502 = vmatprep.subr.mxu0 0.0
        %1503 = vmatpush1.msra.mxu0 0.0
        %1504 = vmatprep.subr.mxu0 0.0
        %1505 = vmatpush1.msra.mxu0 0.0
        %1506 = vmatprep.subr.mxu0 0.0
        %1507 = vmatpush1.msra.mxu0 0.0
        %1508 = vmatprep.subr.mxu0 0.0
        %1509 = vmatpush1.msra.mxu0 0.0
        %1510 = vmatprep.subr.mxu0 0.0
        %1511 = vmatpush1.msra.mxu0 0.0
        %1512 = vmatprep.subr.mxu0 0.0
        %1513 = vmatpush1.msra.mxu0 0.0
        %1514 = vmatprep.subr.mxu0 0.0
        %1515 = vmatpush1.msra.mxu0 0.0
        %1516 = vmatprep.subr.mxu0 0.0
        %1517 = vmatpush1.msra.mxu0 0.0
        %1518 = vmatprep.subr.mxu0 0.0
        %1519 = vmatpush1.msra.mxu0 0.0
        %1520 = vmatprep.subr.mxu0 0.0
        %1521 = vmatpush1.msra.mxu0 0.0
        %1522 = vmatprep.subr.mxu0 0.0
        %1523 = vmatpush1.msra.mxu0 0.0
        %1524 = vmatprep.subr.mxu0 0.0
        %1525 = vmatpush1.msra.mxu0 0.0
        %1526 = vmatprep.subr.mxu0 0.0
        %1527 = vmatpush1.msra.mxu0 0.0
        %1528 = vmatprep.subr.mxu0 0.0
        %1529 = vmatpush1.msra.mxu0 0.0
        %1530 = vmatprep.subr.mxu0 0.0
        %1531 = vmatpush1.msra.mxu0 0.0
        %1532 = vmatprep.subr.mxu0 0.0
        %1533 = vmatpush1.msra.mxu0 0.0
        %1534 = vmatprep.subr.mxu0 0.0
        %1535 = vmatpush1.msra.mxu0 0.0
        %1536 = vmatprep.subr.mxu0 0.0
        %1537 = vmatpush1.msra.mxu0 0.0
        %1538 = vmatprep.subr.mxu0 0.0
        %1539 = vmatpush1.msra.mxu0 0.0
        %1540 = vmatprep.subr.mxu0 0.0
        %1541 = vmatpush1.msra.mxu0 0.0
        %1542 = vmatprep.subr.mxu0 0.0
        %1543 = vmatpush1.msra.mxu0 0.0
        %1544 = vmatprep.subr.mxu0 0.0
        %1545 = vmatpush1.msra.mxu0 0.0
        %1546 = vmatprep.subr.mxu0 0.0
        %1547 = vmatpush1.msra.mxu0 0.0
        %1548 = vmatprep.subr.mxu0 0.0
        %1549 = vmatpush1.msra.mxu0 0.0
        %1550 = vmatprep.subr.mxu0 0.0
        %1551 = vmatpush1.msra.mxu0 0.0
        %1552 = vmatprep.subr.mxu0 0.0
        %1553 = vmatpush1.msra.mxu0 0.0
        %1554 = vmatprep.subr.mxu0 0.0
        %1555 = vmatpush1.msra.mxu0 0.0
        %1556 = vmatprep.subr.mxu0 0.0
        %1557 = vmatpush1.msra.mxu0 0.0
        %1558 = vmatprep.mubr.f32.mxu0 0.0
        %v1559 = vand.u32 %v718, 4294901760
        %1560 = vmatmul.mubr.f32.gmra.mrb[0].mxu0 %v1559
        %v1561 = vpop.f32.mrb[0].mxu0
        %v1562 = vadd.f32 %v1485, %v1561
        %v1563 = vpop.f32.mrb[0].mxu0
        %1564 = vdwg.mxu0
        %1565 = vmatprep.subr.mxu0 0.0
        %v1566 = vand.u32 %v699, 4294901760
        %1567 = vmatpush1.msra.mxu0 %v1566
        %1568 = vmatprep.subr.mxu0 0.0
        %v1569 = vand.u32 %v700, 4294901760
        %1570 = vmatpush1.msra.mxu0 %v1569
        %1571 = vmatprep.subr.mxu0 0.0
        %1572 = vmatpush1.msra.mxu0 0.0
        %1573 = vmatprep.subr.mxu0 0.0
        %1574 = vmatpush1.msra.mxu0 0.0
        %1575 = vmatprep.subr.mxu0 0.0
        %1576 = vmatpush1.msra.mxu0 0.0
        %1577 = vmatprep.subr.mxu0 0.0
        %1578 = vmatpush1.msra.mxu0 0.0
        %1579 = vmatprep.subr.mxu0 0.0
        %1580 = vmatpush1.msra.mxu0 0.0
        %1581 = vmatprep.subr.mxu0 0.0
        %1582 = vmatpush1.msra.mxu0 0.0
        %1583 = vmatprep.subr.mxu0 0.0
        %1584 = vmatpush1.msra.mxu0 0.0
        %1585 = vmatprep.subr.mxu0 0.0
        %1586 = vmatpush1.msra.mxu0 0.0
        %1587 = vmatprep.subr.mxu0 0.0
        %1588 = vmatpush1.msra.mxu0 0.0
        %1589 = vmatprep.subr.mxu0 0.0
        %1590 = vmatpush1.msra.mxu0 0.0
        %1591 = vmatprep.subr.mxu0 0.0
        %1592 = vmatpush1.msra.mxu0 0.0
        %1593 = vmatprep.subr.mxu0 0.0
        %1594 = vmatpush1.msra.mxu0 0.0
        %1595 = vmatprep.subr.mxu0 0.0
        %1596 = vmatpush1.msra.mxu0 0.0
        %1597 = vmatprep.subr.mxu0 0.0
        %1598 = vmatpush1.msra.mxu0 0.0
        %1599 = vmatprep.subr.mxu0 0.0
        %1600 = vmatpush1.msra.mxu0 0.0
        %1601 = vmatprep.subr.mxu0 0.0
        %1602 = vmatpush1.msra.mxu0 0.0
        %1603 = vmatprep.subr.mxu0 0.0
        %1604 = vmatpush1.msra.mxu0 0.0
        %1605 = vmatprep.subr.mxu0 0.0
        %1606 = vmatpush1.msra.mxu0 0.0
        %1607 = vmatprep.subr.mxu0 0.0
        %1608 = vmatpush1.msra.mxu0 0.0
        %1609 = vmatprep.subr.mxu0 0.0
        %1610 = vmatpush1.msra.mxu0 0.0
        %1611 = vmatprep.subr.mxu0 0.0
        %1612 = vmatpush1.msra.mxu0 0.0
        %1613 = vmatprep.subr.mxu0 0.0
        %1614 = vmatpush1.msra.mxu0 0.0
        %1615 = vmatprep.subr.mxu0 0.0
        %1616 = vmatpush1.msra.mxu0 0.0
        %1617 = vmatprep.subr.mxu0 0.0
        %1618 = vmatpush1.msra.mxu0 0.0
        %1619 = vmatprep.subr.mxu0 0.0
        %1620 = vmatpush1.msra.mxu0 0.0
        %1621 = vmatprep.subr.mxu0 0.0
        %1622 = vmatpush1.msra.mxu0 0.0
        %1623 = vmatprep.subr.mxu0 0.0
        %1624 = vmatpush1.msra.mxu0 0.0
        %1625 = vmatprep.subr.mxu0 0.0
        %1626 = vmatpush1.msra.mxu0 0.0
        %1627 = vmatprep.subr.mxu0 0.0
        %1628 = vmatpush1.msra.mxu0 0.0
        %1629 = vmatprep.subr.mxu0 0.0
        %1630 = vmatpush1.msra.mxu0 0.0
        %1631 = vmatprep.mubr.f32.mxu0 0.0
        %v1632 = vand.u32 %v718, 4294901760
        %1633 = vmatmul.mubr.f32.gmra.mrb[0].mxu0 %v1632
        %v1634 = vpop.f32.mrb[0].mxu0
        %v1635 = vadd.f32 %v1562, %v1634
        %v1636 = vpop.f32.mrb[0].mxu0
        %1637 = vdwg.mxu0
        %v1638 = vlaneseq
        %v1639 = vshrl.u32 %v1638, 7
        %v1640 = vsub.s32 4, %v1639
        %v1641 = vrot.slane %v1635, %v1640
        %v1642 = vrcp.pop %v1641
        %v1643 = vmul.f32 %v1635, %v1642
        %vm1644 = vcmask 125952
        %1645 = vst.msk [vmem:[%s163] sm:$0xf] %vm1644, %v1643
        %s1646 = sand.u32 %s90, 1
        %s1647 = scalar_lea.sflag [#allocation3], %s1646
        %s1648 = sand.u32 %s90, 1
        %s1649 = smul.addr %s1648, 4
        %s1650 = scalar_lea.vmem [#allocation2], %s1649
        // Predicated region
        $region29: #{tpu_custom_call.1} parent=27 // pred_check
          %p1651 = pneg %p100
        $region30: #{tpu_custom_call.1} parent=27 // pred_check_branch
          %1653 = sbr.rel (%p1651) target = $region32
        $region31: #{tpu_custom_call.1} parent=27 // pred_region
          %s1655 = ssub.s32 64, 64
          %1656 = vsyncadd %s1647, %s1655
          %s1657 = sadd.s32 %s21, %s20
          %s1658 = smul.addr %s1657, 64
          %s1659 = scalar_lea.hbm %s2, %s1658
          %s1661 = sshll.u32 %s1650, 4
          %s1662 = int_to_ptr.vmem [resolvable:$true] %s1661
          %1664 = dma.vmem_to_hbm [thread:$0]  %s1662, 64, %s1659, %s1647
        $region32: #{tpu_custom_call.1} parent=27 // pred_fallthru
          _
      $region28: #{tpu_custom_call.1} parent=5 // pred_fallthru
        _
      %p1665 = scmp.le.s32.totalorder 2, %s11
      // Predicated region
      $region33: #{tpu_custom_call.1} parent=5 // pred_check
        %p1666 = pneg %p1665
      $region34: #{tpu_custom_call.1} parent=5 // pred_check_branch
        %1668 = sbr.rel (%p1666) target = $region36
      $region35: #{tpu_custom_call.1} parent=5 // pred_region
        %s1669 = ssub.s32 %s11, 2
        // Predicated region
        $region37: #{tpu_custom_call.1} parent=35 // pred_check
          %p1670 = pneg %p106
        $region38: #{tpu_custom_call.1} parent=35 // pred_check_branch
          %1672 = sbr.rel (%p1670) target = $region40
        $region39: #{tpu_custom_call.1} parent=35 // pred_region
          %s1673 = sand.u32 %s91, 1
          %s1674 = scalar_lea.sflag [#allocation3], %s1673
          %s1675 = sand.u32 %s91, 1
          %s1676 = smul.addr %s1675, 4
          %s1677 = scalar_lea.vmem [#allocation2], %s1676
          %1678 = dma.done %s1674, 64
        $region40: #{tpu_custom_call.1} parent=35 // pred_fallthru
          _
      $region36: #{tpu_custom_call.1} parent=5 // pred_fallthru
        _
    $region6: #{tpu_custom_call.1} parent=1 // loop_footer
      %s15 = sadd.s32 1, %s11
    $region7: #{tpu_custom_call.1} parent=1 // loop_footer_branch
      %10 = sbr.rel target = $region3
    $region8: #{tpu_custom_call.1} parent=1 // loop_exit
      _
    %1679 = vsyncpa [#allocation3], 1
    %s1680 = scalar_lea.sflag [#allocation3], 1
    %1681 = vsyncpa %s1680, 1

</llo_original>
